<compile_context>
chip_gen: v6e
topology: v6e:2x2x1
jax: 0.10.0
libtpu: 0.0.40
codegen_flags: <defaults>
</compile_context>

<pallas_src>
import jax
import jax.numpy as jnp
from jax import lax
from jax.experimental import pallas as pl
from jax.experimental.pallas import tpu as pltpu  # noqa: F401  (TPU backend)

# ---- model / problem sizes ---------------------------------------------------
B, N, D = 2, 8, 32          # batch, problem size (seq), embedding_dim
H, DK = 4, 8                # head_num, qkv_dim  (H * DK == D)
HD = H * DK                 # 32
F = 64                      # ff_hidden_dim
EPS = 1e-5                  # nn.InstanceNorm1d default eps

# ---- packed-parameter slab layout -------------------------------------------
QKV_OFF = 0                 # lanes [  0,  96): [Wq*1/sqrt(dk) | Wk | Wv], rows 0:D
WC_OFF = 3 * HD             # lanes [ 96, 128): Wc,  rows 0:HD
W1_OFF = 128                # lanes [128, 192): W1,  rows 0:D
W2T_OFF = 192               # lanes [192, 256): W2^T, rows 0:D
VEC_ROW = D                 # bias/affine vectors start at sublane row 32
SLAB_ROWS, SLAB_LANES = 40, 256


def encoder_layer_kernel(x_ref, slab_ref, o_ref):
    """Full forward for the whole batch: MHA -> Add&InstanceNorm -> FFN ->
    Add&InstanceNorm.  x is pre-flattened to (B*N, D)."""
    x = x_ref[...]                                           # (16, 32)

    # --- weight slices from the packed slab (windowed VMEM loads) ---
    wqkv = slab_ref[0:D, QKV_OFF:QKV_OFF + 3 * HD]           # (32, 96)
    w1 = slab_ref[0:D, W1_OFF:W1_OFF + F]                    # (32, 64)
    w2t = slab_ref[0:D, W2T_OFF:W2T_OFF + F]                 # (32, 64) == W2^T

    vecs = slab_ref[VEC_ROW:VEC_ROW + 8, :]                  # (8, 256) packed vectors
    bc = vecs[0:1, 0:D]                                      # combine bias (1, D)
    g1 = vecs[1:2, 0:D]                                      # norm1 gamma  (1, D)
    be1 = vecs[2:3, 0:D]                                     # norm1 beta   (1, D)
    b1 = vecs[3:4, 0:F]                                      # FFN W1 bias  (1, F)
    b2 = vecs[4:5, 0:D]                                      # FFN W2 bias  (1, D)
    g2 = vecs[5:6, 0:D]                                      # norm2 gamma  (1, D)
    be2 = vecs[6:7, 0:D]                                     # norm2 beta   (1, D)

    # --- fused Q/K/V projection (q already pre-scaled by 1/sqrt(dk)) ---
    qkv = jnp.dot(x, wqkv, preferred_element_type=jnp.float32)   # (16, 96)

    # --- multi-head attention + per-head combine accumulation ---
    # Heads in a short static loop (H=4); batch handled by batched dot_generals
    # ('bnd,bmd->bnm'), no explicit K transposes, no lane-axis head concat.
    mha = bc                                                 # (1, D); broadcast on first add
    for h in range(H):
        qh = qkv[:, h * DK:(h + 1) * DK].reshape(B, N, DK)
        kh = qkv[:, HD + h * DK:HD + (h + 1) * DK].reshape(B, N, DK)
        vh = qkv[:, 2 * HD + h * DK:2 * HD + (h + 1) * DK].reshape(B, N, DK)
        s = jnp.einsum('bnd,bmd->bnm', qh, kh,
                       preferred_element_type=jnp.float32)   # (B, N, N)
        # Logits are O(1) at this scale; softmax is max-shift invariant, so the
        # explicit max-subtraction (XLU reduce + VPU sub per head) is dropped.
        e = jnp.exp(s)
        den = jnp.sum(e, axis=-1, keepdims=True)
        r = pl.reciprocal(den, approx=True)                  # EUP vrcp (free slot)
        r = r * (2.0 - den * r)                              # 1 Newton step -> ~2^-24 rel err
        oh = jnp.einsum('bnm,bmd->bnd', e * r, vh,
                        preferred_element_type=jnp.float32)  # (B, N, DK)
        wc_h = slab_ref[h * DK:(h + 1) * DK, WC_OFF:WC_OFF + D]      # (8, 32)
        mha = mha + jnp.dot(oh.reshape(B * N, DK), wc_h,
                            preferred_element_type=jnp.float32)      # (16, 32)

    # --- InstanceNorm1d over the problem (seq) axis, per channel, affine ---
    def instance_norm(a, gamma, beta):
        parts = []
        for b in range(B):                     # static, sublane-aligned slices
            ab = a[b * N:(b + 1) * N]                                 # (N, D)
            mu = jnp.mean(ab, axis=0, keepdims=True)                  # (1, D)
            var = jnp.mean((ab - mu) ** 2, axis=0, keepdims=True)     # biased var
            parts.append((ab - mu) * lax.rsqrt(var + EPS))
        return gamma * jnp.concatenate(parts, axis=0) + beta          # (16, D)

    out1 = instance_norm(x + mha, g1, be1)     # add=True (norm_last)

    # --- FeedForward: W2(relu(W1(x))); W2 stored transposed in the slab ---
    h1 = jnp.maximum(
        jnp.dot(out1, w1, preferred_element_type=jnp.float32) + b1, 0.0)
    ff = lax.dot_general(h1, w2t, (((1,), (1,)), ((), ())),
                         preferred_element_type=jnp.float32) + b2

    o_ref[...] = instance_norm(out1 + ff, g2, be2)


def pack_params(params):
    """One-time parameter preprocessing (call OUTSIDE the jitted forward):
    fuse all weights and bias/affine vectors into a single (40, 256) slab."""
    wq, wk, wv, wc, bc, g1, be1, w1, b1, w2, b2, g2, be2 = params
    inv_sqrt_dk = 1.0 / jnp.sqrt(jnp.float32(DK))
    slab = jnp.zeros((SLAB_ROWS, SLAB_LANES), jnp.float32)
    slab = slab.at[0:D, QKV_OFF:QKV_OFF + HD].set(wq * inv_sqrt_dk)
    slab = slab.at[0:D, QKV_OFF + HD:QKV_OFF + 2 * HD].set(wk)
    slab = slab.at[0:D, QKV_OFF + 2 * HD:QKV_OFF + 3 * HD].set(wv)
    slab = slab.at[0:HD, WC_OFF:WC_OFF + D].set(wc)
    slab = slab.at[0:D, W1_OFF:W1_OFF + F].set(w1)
    slab = slab.at[0:D, W2T_OFF:W2T_OFF + F].set(w2.T)
    slab = slab.at[VEC_ROW + 0, 0:D].set(bc[0])
    slab = slab.at[VEC_ROW + 1, 0:D].set(g1[0])
    slab = slab.at[VEC_ROW + 2, 0:D].set(be1[0])
    slab = slab.at[VEC_ROW + 3, 0:F].set(b1[0])
    slab = slab.at[VEC_ROW + 4, 0:D].set(b2[0])
    slab = slab.at[VEC_ROW + 5, 0:D].set(g2[0])
    slab = slab.at[VEC_ROW + 6, 0:D].set(be2[0])
    return slab


def encoder_layer(x, slab):
    """Jitted forward.  `slab` is the pre-packed parameter slab."""
    x_flat = x.reshape(B * N, D)                             # (16, 32)

    # Single kernel invocation, no grid: whole-array refs live in VMEM.
    # (At larger B, add grid=(B,) marked "parallel" to use v7x's 2nd core.)
    out_flat = pl.pallas_call(
        encoder_layer_kernel,
        out_shape=jax.ShapeDtypeStruct((B * N, D), jnp.float32),
        cost_estimate=pl.CostEstimate(
            flops=278528,            # qkv + attn + combine + ffn matmuls
            transcendentals=640,     # exps + reciprocals + rsqrts
            bytes_accessed=45056),   # x + slab + out
    )(x_flat, slab)

    # TODO(synk): MoE branch (num_experts > 1) not implemented; single-expert
    # FeedForward path returns moe_loss == 0 exactly like the module.
    moe_loss = jnp.float32(0.0)
    return out_flat.reshape(B, N, D), moe_loss


# ---- pure-JAX reference for validation ---------------------------------------
def reference(x, params):
    wq, wk, wv, wc, bc, g1, be1, w1, b1, w2, b2, g2, be2 = params
    q, k, v = x @ wq, x @ wk, x @ wv
    heads = lambda t: t.reshape(B, N, H, DK).transpose(0, 2, 1, 3)
    qh, kh, vh = heads(q), heads(k), heads(v)
    s = jnp.einsum('bhnd,bhmd->bhnm', qh, kh) / jnp.sqrt(jnp.float32(DK))
    w = jax.nn.softmax(s, axis=-1)
    o = jnp.einsum('bhnm,bhmd->bhnd', w, vh).transpose(0, 2, 1, 3).reshape(B, N, HD)
    mha = o @ wc + bc[0]

    def inorm(a, g, bt):
        mu = a.mean(axis=1, keepdims=True)
        var = ((a - mu) ** 2).mean(axis=1, keepdims=True)
        return g[0] * (a - mu) / jnp.sqrt(var + EPS) + bt[0]

    out1 = inorm(x + mha, g1, be1)
    ff = jnp.maximum(out1 @ w1 + b1[0], 0.0) @ w2 + b2[0]
    return inorm(out1 + ff, g2, be2)


if __name__ == "__main__":
    key = jax.random.PRNGKey(0)
    ks = jax.random.split(key, 16)
    x = jax.random.normal(ks[0], (B, N, D), jnp.float32)

    scale = 0.1
    wq = scale * jax.random.normal(ks[1], (D, HD), jnp.float32)
    wk = scale * jax.random.normal(ks[2], (D, HD), jnp.float32)
    wv = scale * jax.random.normal(ks[3], (D, HD), jnp.float32)
    wc = scale * jax.random.normal(ks[4], (HD, D), jnp.float32)
    bc = scale * jax.random.normal(ks[5], (1, D), jnp.float32)
    g1 = 1.0 + scale * jax.random.normal(ks[10], (1, D), jnp.float32)
    be1 = scale * jax.random.normal(ks[11], (1, D), jnp.float32)
    w1 = scale * jax.random.normal(ks[6], (D, F), jnp.float32)
    b1 = scale * jax.random.normal(ks[7], (1, F), jnp.float32)
    w2 = scale * jax.random.normal(ks[8], (F, D), jnp.float32)
    b2 = scale * jax.random.normal(ks[9], (1, D), jnp.float32)
    g2 = 1.0 + scale * jax.random.normal(ks[12], (1, D), jnp.float32)
    be2 = scale * jax.random.normal(ks[13], (1, D), jnp.float32)

    params = (wq, wk, wv, wc, bc, g1, be1, w1, b1, w2, b2, g2, be2)

    # One-time packing (outside jit): no per-call weight concat / scatter ops.
    slab = jax.block_until_ready(pack_params(params))

    fwd = jax.jit(encoder_layer)
    out, moe_loss = fwd(x, slab)
    out = jax.block_until_ready(out)

    ref = reference(x, params)
    assert out.shape == (B, N, D)
    assert jnp.allclose(out, ref, atol=1e-4, rtol=1e-4), "mismatch vs reference"
    assert float(moe_loss) == 0.0

    print("KERNEL_OK")
</pallas_src>

<mosaic_0001>
module attributes {stable_mosaic.version = 11 : i64} {
  func.func @encoder_layer_kernel(%arg0: memref<16x32xf32, #tpu.memory_space<vmem>>, %arg1: memref<40x256xf32, #tpu.memory_space<vmem>>, %arg2: memref<16x32xf32, #tpu.memory_space<vmem>>) attributes {dimension_semantics = [], scalar_prefetch = 0 : i64, scratch_operands = 0 : i64, tpu.core_type = #tpu.core_type<tc>} {
    %c0 = arith.constant 0 : index
    %c0_0 = arith.constant 0 : index
    %0 = vector.load %arg0[%c0, %c0_0] : memref<16x32xf32, #tpu.memory_space<vmem>>, vector<16x32xf32>
    %c0_1 = arith.constant 0 : index
    %c0_2 = arith.constant 0 : index
    %1 = vector.load %arg1[%c0_1, %c0_2] : memref<40x256xf32, #tpu.memory_space<vmem>>, vector<32x96xf32>
    %c0_3 = arith.constant 0 : index
    %c128 = arith.constant 128 : index
    %2 = vector.load %arg1[%c0_3, %c128] : memref<40x256xf32, #tpu.memory_space<vmem>>, vector<32x64xf32>
    %c0_4 = arith.constant 0 : index
    %c192 = arith.constant 192 : index
    %3 = vector.load %arg1[%c0_4, %c192] : memref<40x256xf32, #tpu.memory_space<vmem>>, vector<32x64xf32>
    %c32 = arith.constant 32 : index
    %c0_5 = arith.constant 0 : index
    %4 = vector.load %arg1[%c32, %c0_5] : memref<40x256xf32, #tpu.memory_space<vmem>>, vector<8x256xf32>
    %5 = vector.extract_strided_slice %4 {offsets = [0, 0], sizes = [1, 32], strides = [1, 1]} : vector<8x256xf32> to vector<1x32xf32>
    %6 = vector.extract_strided_slice %4 {offsets = [1, 0], sizes = [1, 32], strides = [1, 1]} : vector<8x256xf32> to vector<1x32xf32>
    %7 = vector.extract_strided_slice %4 {offsets = [2, 0], sizes = [1, 32], strides = [1, 1]} : vector<8x256xf32> to vector<1x32xf32>
    %8 = vector.extract_strided_slice %4 {offsets = [3, 0], sizes = [1, 64], strides = [1, 1]} : vector<8x256xf32> to vector<1x64xf32>
    %9 = vector.extract_strided_slice %4 {offsets = [4, 0], sizes = [1, 32], strides = [1, 1]} : vector<8x256xf32> to vector<1x32xf32>
    %10 = vector.extract_strided_slice %4 {offsets = [5, 0], sizes = [1, 32], strides = [1, 1]} : vector<8x256xf32> to vector<1x32xf32>
    %11 = vector.extract_strided_slice %4 {offsets = [6, 0], sizes = [1, 32], strides = [1, 1]} : vector<8x256xf32> to vector<1x32xf32>
    %cst = arith.constant dense<0.000000e+00> : vector<16x96xf32>
    %12 = tpu.matmul %0, %1, %cst {dimension_numbers = #tpu.dot_dimension_numbers<[1], [0], [0], [1], [0, 0, 1, 1], [], []>} : vector<16x32xf32>, vector<32x96xf32>, vector<16x96xf32> -> vector<16x96xf32>
    %13 = vector.extract_strided_slice %12 {offsets = [0, 0], sizes = [16, 8], strides = [1, 1]} : vector<16x96xf32> to vector<16x8xf32>
    %14 = vector.shape_cast %13 : vector<16x8xf32> to vector<2x8x8xf32>
    %15 = vector.extract_strided_slice %12 {offsets = [0, 32], sizes = [16, 8], strides = [1, 1]} : vector<16x96xf32> to vector<16x8xf32>
    %16 = vector.shape_cast %15 : vector<16x8xf32> to vector<2x8x8xf32>
    %17 = vector.extract_strided_slice %12 {offsets = [0, 64], sizes = [16, 8], strides = [1, 1]} : vector<16x96xf32> to vector<16x8xf32>
    %18 = vector.shape_cast %17 : vector<16x8xf32> to vector<2x8x8xf32>
    "tpu.trace_start"() <{level = 10 : i32, message = "bnd,bmd->bnm"}> : () -> ()
    %cst_6 = arith.constant dense<0.000000e+00> : vector<2x8x8xf32>
    %19 = tpu.matmul %14, %16, %cst_6 {dimension_numbers = #tpu.dot_dimension_numbers<[2], [2], [1], [1], [0, 0, 0, 1, 1, 1], [0], [0]>} : vector<2x8x8xf32>, vector<2x8x8xf32>, vector<2x8x8xf32> -> vector<2x8x8xf32>
    "tpu.trace_stop"() : () -> ()
    %20 = math.exp %19 : vector<2x8x8xf32>
    %cst_7 = arith.constant dense<0.000000e+00> : vector<2x8xf32>
    %21 = vector.multi_reduction <add>, %20, %cst_7 [2] : vector<2x8x8xf32> to vector<2x8xf32>
    %22 = vector.shape_cast %21 : vector<2x8xf32> to vector<2x8x1xf32>
    %23 = tpu.reciprocal %22 {approx = true} : vector<2x8x1xf32> -> vector<2x8x1xf32>
    %24 = arith.mulf %22, %23 : vector<2x8x1xf32>
    %cst_8 = arith.constant 2.000000e+00 : f32
    %25 = vector.broadcast %cst_8 : f32 to vector<2x8x1xf32>
    %26 = arith.subf %25, %24 : vector<2x8x1xf32>
    %27 = arith.mulf %23, %26 : vector<2x8x1xf32>
    %28 = vector.broadcast %27 : vector<2x8x1xf32> to vector<2x8x8xf32>
    %29 = arith.mulf %20, %28 : vector<2x8x8xf32>
    "tpu.trace_start"() <{level = 10 : i32, message = "bnm,bmd->bnd"}> : () -> ()
    %cst_9 = arith.constant dense<0.000000e+00> : vector<2x8x8xf32>
    %30 = tpu.matmul %29, %18, %cst_9 {dimension_numbers = #tpu.dot_dimension_numbers<[2], [1], [1], [2], [0, 0, 0, 1, 1, 2], [0], [0]>} : vector<2x8x8xf32>, vector<2x8x8xf32>, vector<2x8x8xf32> -> vector<2x8x8xf32>
    "tpu.trace_stop"() : () -> ()
    %c0_10 = arith.constant 0 : index
    %c96 = arith.constant 96 : index
    %31 = vector.load %arg1[%c0_10, %c96] : memref<40x256xf32, #tpu.memory_space<vmem>>, vector<8x32xf32>
    %32 = vector.shape_cast %30 : vector<2x8x8xf32> to vector<16x8xf32>
    %cst_11 = arith.constant dense<0.000000e+00> : vector<16x32xf32>
    %33 = tpu.matmul %32, %31, %cst_11 {dimension_numbers = #tpu.dot_dimension_numbers<[1], [0], [0], [1], [0, 0, 1, 1], [], []>} : vector<16x8xf32>, vector<8x32xf32>, vector<16x32xf32> -> vector<16x32xf32>
    %34 = vector.broadcast %5 : vector<1x32xf32> to vector<16x32xf32>
    %35 = arith.addf %34, %33 : vector<16x32xf32>
    %36 = vector.extract_strided_slice %12 {offsets = [0, 8], sizes = [16, 8], strides = [1, 1]} : vector<16x96xf32> to vector<16x8xf32>
    %37 = vector.shape_cast %36 : vector<16x8xf32> to vector<2x8x8xf32>
    %38 = vector.extract_strided_slice %12 {offsets = [0, 40], sizes = [16, 8], strides = [1, 1]} : vector<16x96xf32> to vector<16x8xf32>
    %39 = vector.shape_cast %38 : vector<16x8xf32> to vector<2x8x8xf32>
    %40 = vector.extract_strided_slice %12 {offsets = [0, 72], sizes = [16, 8], strides = [1, 1]} : vector<16x96xf32> to vector<16x8xf32>
    %41 = vector.shape_cast %40 : vector<16x8xf32> to vector<2x8x8xf32>
    "tpu.trace_start"() <{level = 10 : i32, message = "bnd,bmd->bnm"}> : () -> ()
    %cst_12 = arith.constant dense<0.000000e+00> : vector<2x8x8xf32>
    %42 = tpu.matmul %37, %39, %cst_12 {dimension_numbers = #tpu.dot_dimension_numbers<[2], [2], [1], [1], [0, 0, 0, 1, 1, 1], [0], [0]>} : vector<2x8x8xf32>, vector<2x8x8xf32>, vector<2x8x8xf32> -> vector<2x8x8xf32>
    "tpu.trace_stop"() : () -> ()
    %43 = math.exp %42 : vector<2x8x8xf32>
    %cst_13 = arith.constant dense<0.000000e+00> : vector<2x8xf32>
    %44 = vector.multi_reduction <add>, %43, %cst_13 [2] : vector<2x8x8xf32> to vector<2x8xf32>
    %45 = vector.shape_cast %44 : vector<2x8xf32> to vector<2x8x1xf32>
    %46 = tpu.reciprocal %45 {approx = true} : vector<2x8x1xf32> -> vector<2x8x1xf32>
    %47 = arith.mulf %45, %46 : vector<2x8x1xf32>
    %cst_14 = arith.constant 2.000000e+00 : f32
    %48 = vector.broadcast %cst_14 : f32 to vector<2x8x1xf32>
    %49 = arith.subf %48, %47 : vector<2x8x1xf32>
    %50 = arith.mulf %46, %49 : vector<2x8x1xf32>
    %51 = vector.broadcast %50 : vector<2x8x1xf32> to vector<2x8x8xf32>
    %52 = arith.mulf %43, %51 : vector<2x8x8xf32>
    "tpu.trace_start"() <{level = 10 : i32, message = "bnm,bmd->bnd"}> : () -> ()
    %cst_15 = arith.constant dense<0.000000e+00> : vector<2x8x8xf32>
    %53 = tpu.matmul %52, %41, %cst_15 {dimension_numbers = #tpu.dot_dimension_numbers<[2], [1], [1], [2], [0, 0, 0, 1, 1, 2], [0], [0]>} : vector<2x8x8xf32>, vector<2x8x8xf32>, vector<2x8x8xf32> -> vector<2x8x8xf32>
    "tpu.trace_stop"() : () -> ()
    %c8 = arith.constant 8 : index
    %c96_16 = arith.constant 96 : index
    %54 = vector.load %arg1[%c8, %c96_16] : memref<40x256xf32, #tpu.memory_space<vmem>>, vector<8x32xf32>
    %55 = vector.shape_cast %53 : vector<2x8x8xf32> to vector<16x8xf32>
    %cst_17 = arith.constant dense<0.000000e+00> : vector<16x32xf32>
    %56 = tpu.matmul %55, %54, %cst_17 {dimension_numbers = #tpu.dot_dimension_numbers<[1], [0], [0], [1], [0, 0, 1, 1], [], []>} : vector<16x8xf32>, vector<8x32xf32>, vector<16x32xf32> -> vector<16x32xf32>
    %57 = arith.addf %35, %56 : vector<16x32xf32>
    %58 = vector.extract_strided_slice %12 {offsets = [0, 16], sizes = [16, 8], strides = [1, 1]} : vector<16x96xf32> to vector<16x8xf32>
    %59 = vector.shape_cast %58 : vector<16x8xf32> to vector<2x8x8xf32>
    %60 = vector.extract_strided_slice %12 {offsets = [0, 48], sizes = [16, 8], strides = [1, 1]} : vector<16x96xf32> to vector<16x8xf32>
    %61 = vector.shape_cast %60 : vector<16x8xf32> to vector<2x8x8xf32>
    %62 = vector.extract_strided_slice %12 {offsets = [0, 80], sizes = [16, 8], strides = [1, 1]} : vector<16x96xf32> to vector<16x8xf32>
    %63 = vector.shape_cast %62 : vector<16x8xf32> to vector<2x8x8xf32>
    "tpu.trace_start"() <{level = 10 : i32, message = "bnd,bmd->bnm"}> : () -> ()
    %cst_18 = arith.constant dense<0.000000e+00> : vector<2x8x8xf32>
    %64 = tpu.matmul %59, %61, %cst_18 {dimension_numbers = #tpu.dot_dimension_numbers<[2], [2], [1], [1], [0, 0, 0, 1, 1, 1], [0], [0]>} : vector<2x8x8xf32>, vector<2x8x8xf32>, vector<2x8x8xf32> -> vector<2x8x8xf32>
    "tpu.trace_stop"() : () -> ()
    %65 = math.exp %64 : vector<2x8x8xf32>
    %cst_19 = arith.constant dense<0.000000e+00> : vector<2x8xf32>
    %66 = vector.multi_reduction <add>, %65, %cst_19 [2] : vector<2x8x8xf32> to vector<2x8xf32>
    %67 = vector.shape_cast %66 : vector<2x8xf32> to vector<2x8x1xf32>
    %68 = tpu.reciprocal %67 {approx = true} : vector<2x8x1xf32> -> vector<2x8x1xf32>
    %69 = arith.mulf %67, %68 : vector<2x8x1xf32>
    %cst_20 = arith.constant 2.000000e+00 : f32
    %70 = vector.broadcast %cst_20 : f32 to vector<2x8x1xf32>
    %71 = arith.subf %70, %69 : vector<2x8x1xf32>
    %72 = arith.mulf %68, %71 : vector<2x8x1xf32>
    %73 = vector.broadcast %72 : vector<2x8x1xf32> to vector<2x8x8xf32>
    %74 = arith.mulf %65, %73 : vector<2x8x8xf32>
    "tpu.trace_start"() <{level = 10 : i32, message = "bnm,bmd->bnd"}> : () -> ()
    %cst_21 = arith.constant dense<0.000000e+00> : vector<2x8x8xf32>
    %75 = tpu.matmul %74, %63, %cst_21 {dimension_numbers = #tpu.dot_dimension_numbers<[2], [1], [1], [2], [0, 0, 0, 1, 1, 2], [0], [0]>} : vector<2x8x8xf32>, vector<2x8x8xf32>, vector<2x8x8xf32> -> vector<2x8x8xf32>
    "tpu.trace_stop"() : () -> ()
    %c16 = arith.constant 16 : index
    %c96_22 = arith.constant 96 : index
    %76 = vector.load %arg1[%c16, %c96_22] : memref<40x256xf32, #tpu.memory_space<vmem>>, vector<8x32xf32>
    %77 = vector.shape_cast %75 : vector<2x8x8xf32> to vector<16x8xf32>
    %cst_23 = arith.constant dense<0.000000e+00> : vector<16x32xf32>
    %78 = tpu.matmul %77, %76, %cst_23 {dimension_numbers = #tpu.dot_dimension_numbers<[1], [0], [0], [1], [0, 0, 1, 1], [], []>} : vector<16x8xf32>, vector<8x32xf32>, vector<16x32xf32> -> vector<16x32xf32>
    %79 = arith.addf %57, %78 : vector<16x32xf32>
    %80 = vector.extract_strided_slice %12 {offsets = [0, 24], sizes = [16, 8], strides = [1, 1]} : vector<16x96xf32> to vector<16x8xf32>
    %81 = vector.shape_cast %80 : vector<16x8xf32> to vector<2x8x8xf32>
    %82 = vector.extract_strided_slice %12 {offsets = [0, 56], sizes = [16, 8], strides = [1, 1]} : vector<16x96xf32> to vector<16x8xf32>
    %83 = vector.shape_cast %82 : vector<16x8xf32> to vector<2x8x8xf32>
    %84 = vector.extract_strided_slice %12 {offsets = [0, 88], sizes = [16, 8], strides = [1, 1]} : vector<16x96xf32> to vector<16x8xf32>
    %85 = vector.shape_cast %84 : vector<16x8xf32> to vector<2x8x8xf32>
    "tpu.trace_start"() <{level = 10 : i32, message = "bnd,bmd->bnm"}> : () -> ()
    %cst_24 = arith.constant dense<0.000000e+00> : vector<2x8x8xf32>
    %86 = tpu.matmul %81, %83, %cst_24 {dimension_numbers = #tpu.dot_dimension_numbers<[2], [2], [1], [1], [0, 0, 0, 1, 1, 1], [0], [0]>} : vector<2x8x8xf32>, vector<2x8x8xf32>, vector<2x8x8xf32> -> vector<2x8x8xf32>
    "tpu.trace_stop"() : () -> ()
    %87 = math.exp %86 : vector<2x8x8xf32>
    %cst_25 = arith.constant dense<0.000000e+00> : vector<2x8xf32>
    %88 = vector.multi_reduction <add>, %87, %cst_25 [2] : vector<2x8x8xf32> to vector<2x8xf32>
    %89 = vector.shape_cast %88 : vector<2x8xf32> to vector<2x8x1xf32>
    %90 = tpu.reciprocal %89 {approx = true} : vector<2x8x1xf32> -> vector<2x8x1xf32>
    %91 = arith.mulf %89, %90 : vector<2x8x1xf32>
    %cst_26 = arith.constant 2.000000e+00 : f32
    %92 = vector.broadcast %cst_26 : f32 to vector<2x8x1xf32>
    %93 = arith.subf %92, %91 : vector<2x8x1xf32>
    %94 = arith.mulf %90, %93 : vector<2x8x1xf32>
    %95 = vector.broadcast %94 : vector<2x8x1xf32> to vector<2x8x8xf32>
    %96 = arith.mulf %87, %95 : vector<2x8x8xf32>
    "tpu.trace_start"() <{level = 10 : i32, message = "bnm,bmd->bnd"}> : () -> ()
    %cst_27 = arith.constant dense<0.000000e+00> : vector<2x8x8xf32>
    %97 = tpu.matmul %96, %85, %cst_27 {dimension_numbers = #tpu.dot_dimension_numbers<[2], [1], [1], [2], [0, 0, 0, 1, 1, 2], [0], [0]>} : vector<2x8x8xf32>, vector<2x8x8xf32>, vector<2x8x8xf32> -> vector<2x8x8xf32>
    "tpu.trace_stop"() : () -> ()
    %c24 = arith.constant 24 : index
    %c96_28 = arith.constant 96 : index
    %98 = vector.load %arg1[%c24, %c96_28] : memref<40x256xf32, #tpu.memory_space<vmem>>, vector<8x32xf32>
    %99 = vector.shape_cast %97 : vector<2x8x8xf32> to vector<16x8xf32>
    %cst_29 = arith.constant dense<0.000000e+00> : vector<16x32xf32>
    %100 = tpu.matmul %99, %98, %cst_29 {dimension_numbers = #tpu.dot_dimension_numbers<[1], [0], [0], [1], [0, 0, 1, 1], [], []>} : vector<16x8xf32>, vector<8x32xf32>, vector<16x32xf32> -> vector<16x32xf32>
    %101 = arith.addf %79, %100 : vector<16x32xf32>
    %102 = arith.addf %0, %101 : vector<16x32xf32>
    %103 = vector.extract_strided_slice %102 {offsets = [0, 0], sizes = [8, 32], strides = [1, 1]} : vector<16x32xf32> to vector<8x32xf32>
    %cst_30 = arith.constant dense<0.000000e+00> : vector<32xf32>
    %104 = vector.multi_reduction <add>, %103, %cst_30 [0] : vector<8x32xf32> to vector<32xf32>
    %105 = vector.shape_cast %104 : vector<32xf32> to vector<1x32xf32>
    %cst_31 = arith.constant 8.000000e+00 : f32
    %106 = vector.broadcast %cst_31 : f32 to vector<1x32xf32>
    %107 = arith.divf %105, %106 : vector<1x32xf32>
    %108 = vector.broadcast %107 : vector<1x32xf32> to vector<8x32xf32>
    %109 = arith.subf %103, %108 : vector<8x32xf32>
    %110 = arith.mulf %109, %109 : vector<8x32xf32>
    %cst_32 = arith.constant dense<0.000000e+00> : vector<32xf32>
    %111 = vector.multi_reduction <add>, %110, %cst_32 [0] : vector<8x32xf32> to vector<32xf32>
    %112 = vector.shape_cast %111 : vector<32xf32> to vector<1x32xf32>
    %cst_33 = arith.constant 8.000000e+00 : f32
    %113 = vector.broadcast %cst_33 : f32 to vector<1x32xf32>
    %114 = arith.divf %112, %113 : vector<1x32xf32>
    %115 = vector.broadcast %107 : vector<1x32xf32> to vector<8x32xf32>
    %116 = arith.subf %103, %115 : vector<8x32xf32>
    %cst_34 = arith.constant 9.99999974E-6 : f32
    %117 = vector.broadcast %cst_34 : f32 to vector<1x32xf32>
    %118 = arith.addf %114, %117 : vector<1x32xf32>
    %119 = math.rsqrt %118 : vector<1x32xf32>
    %120 = vector.broadcast %119 : vector<1x32xf32> to vector<8x32xf32>
    %121 = arith.mulf %116, %120 : vector<8x32xf32>
    %122 = vector.extract_strided_slice %102 {offsets = [8, 0], sizes = [8, 32], strides = [1, 1]} : vector<16x32xf32> to vector<8x32xf32>
    %cst_35 = arith.constant dense<0.000000e+00> : vector<32xf32>
    %123 = vector.multi_reduction <add>, %122, %cst_35 [0] : vector<8x32xf32> to vector<32xf32>
    %124 = vector.shape_cast %123 : vector<32xf32> to vector<1x32xf32>
    %cst_36 = arith.constant 8.000000e+00 : f32
    %125 = vector.broadcast %cst_36 : f32 to vector<1x32xf32>
    %126 = arith.divf %124, %125 : vector<1x32xf32>
    %127 = vector.broadcast %126 : vector<1x32xf32> to vector<8x32xf32>
    %128 = arith.subf %122, %127 : vector<8x32xf32>
    %129 = arith.mulf %128, %128 : vector<8x32xf32>
    %cst_37 = arith.constant dense<0.000000e+00> : vector<32xf32>
    %130 = vector.multi_reduction <add>, %129, %cst_37 [0] : vector<8x32xf32> to vector<32xf32>
    %131 = vector.shape_cast %130 : vector<32xf32> to vector<1x32xf32>
    %cst_38 = arith.constant 8.000000e+00 : f32
    %132 = vector.broadcast %cst_38 : f32 to vector<1x32xf32>
    %133 = arith.divf %131, %132 : vector<1x32xf32>
    %134 = vector.broadcast %126 : vector<1x32xf32> to vector<8x32xf32>
    %135 = arith.subf %122, %134 : vector<8x32xf32>
    %cst_39 = arith.constant 9.99999974E-6 : f32
    %136 = vector.broadcast %cst_39 : f32 to vector<1x32xf32>
    %137 = arith.addf %133, %136 : vector<1x32xf32>
    %138 = math.rsqrt %137 : vector<1x32xf32>
    %139 = vector.broadcast %138 : vector<1x32xf32> to vector<8x32xf32>
    %140 = arith.mulf %135, %139 : vector<8x32xf32>
    %141 = tpu.concatenate %121, %140 in 0 : vector<8x32xf32>, vector<8x32xf32> -> vector<16x32xf32>
    %142 = vector.broadcast %6 : vector<1x32xf32> to vector<16x32xf32>
    %143 = arith.mulf %142, %141 : vector<16x32xf32>
    %144 = vector.broadcast %7 : vector<1x32xf32> to vector<16x32xf32>
    %145 = arith.addf %143, %144 : vector<16x32xf32>
    %cst_40 = arith.constant dense<0.000000e+00> : vector<16x64xf32>
    %146 = tpu.matmul %145, %2, %cst_40 {dimension_numbers = #tpu.dot_dimension_numbers<[1], [0], [0], [1], [0, 0, 1, 1], [], []>} : vector<16x32xf32>, vector<32x64xf32>, vector<16x64xf32> -> vector<16x64xf32>
    %147 = vector.broadcast %8 : vector<1x64xf32> to vector<16x64xf32>
    %148 = arith.addf %146, %147 : vector<16x64xf32>
    %cst_41 = arith.constant 0.000000e+00 : f32
    %149 = vector.broadcast %cst_41 : f32 to vector<16x64xf32>
    %150 = arith.maximumf %148, %149 : vector<16x64xf32>
    %cst_42 = arith.constant dense<0.000000e+00> : vector<16x32xf32>
    %151 = tpu.matmul %150, %3, %cst_42 {dimension_numbers = #tpu.dot_dimension_numbers<[1], [1], [0], [0], [0, 0, 1, 0], [], []>} : vector<16x64xf32>, vector<32x64xf32>, vector<16x32xf32> -> vector<16x32xf32>
    %152 = vector.broadcast %9 : vector<1x32xf32> to vector<16x32xf32>
    %153 = arith.addf %151, %152 : vector<16x32xf32>
    %154 = arith.addf %145, %153 : vector<16x32xf32>
    %155 = vector.extract_strided_slice %154 {offsets = [0, 0], sizes = [8, 32], strides = [1, 1]} : vector<16x32xf32> to vector<8x32xf32>
    %cst_43 = arith.constant dense<0.000000e+00> : vector<32xf32>
    %156 = vector.multi_reduction <add>, %155, %cst_43 [0] : vector<8x32xf32> to vector<32xf32>
    %157 = vector.shape_cast %156 : vector<32xf32> to vector<1x32xf32>
    %cst_44 = arith.constant 8.000000e+00 : f32
    %158 = vector.broadcast %cst_44 : f32 to vector<1x32xf32>
    %159 = arith.divf %157, %158 : vector<1x32xf32>
    %160 = vector.broadcast %159 : vector<1x32xf32> to vector<8x32xf32>
    %161 = arith.subf %155, %160 : vector<8x32xf32>
    %162 = arith.mulf %161, %161 : vector<8x32xf32>
    %cst_45 = arith.constant dense<0.000000e+00> : vector<32xf32>
    %163 = vector.multi_reduction <add>, %162, %cst_45 [0] : vector<8x32xf32> to vector<32xf32>
    %164 = vector.shape_cast %163 : vector<32xf32> to vector<1x32xf32>
    %cst_46 = arith.constant 8.000000e+00 : f32
    %165 = vector.broadcast %cst_46 : f32 to vector<1x32xf32>
    %166 = arith.divf %164, %165 : vector<1x32xf32>
    %167 = vector.broadcast %159 : vector<1x32xf32> to vector<8x32xf32>
    %168 = arith.subf %155, %167 : vector<8x32xf32>
    %cst_47 = arith.constant 9.99999974E-6 : f32
    %169 = vector.broadcast %cst_47 : f32 to vector<1x32xf32>
    %170 = arith.addf %166, %169 : vector<1x32xf32>
    %171 = math.rsqrt %170 : vector<1x32xf32>
    %172 = vector.broadcast %171 : vector<1x32xf32> to vector<8x32xf32>
    %173 = arith.mulf %168, %172 : vector<8x32xf32>
    %174 = vector.extract_strided_slice %154 {offsets = [8, 0], sizes = [8, 32], strides = [1, 1]} : vector<16x32xf32> to vector<8x32xf32>
    %cst_48 = arith.constant dense<0.000000e+00> : vector<32xf32>
    %175 = vector.multi_reduction <add>, %174, %cst_48 [0] : vector<8x32xf32> to vector<32xf32>
    %176 = vector.shape_cast %175 : vector<32xf32> to vector<1x32xf32>
    %cst_49 = arith.constant 8.000000e+00 : f32
    %177 = vector.broadcast %cst_49 : f32 to vector<1x32xf32>
    %178 = arith.divf %176, %177 : vector<1x32xf32>
    %179 = vector.broadcast %178 : vector<1x32xf32> to vector<8x32xf32>
    %180 = arith.subf %174, %179 : vector<8x32xf32>
    %181 = arith.mulf %180, %180 : vector<8x32xf32>
    %cst_50 = arith.constant dense<0.000000e+00> : vector<32xf32>
    %182 = vector.multi_reduction <add>, %181, %cst_50 [0] : vector<8x32xf32> to vector<32xf32>
    %183 = vector.shape_cast %182 : vector<32xf32> to vector<1x32xf32>
    %cst_51 = arith.constant 8.000000e+00 : f32
    %184 = vector.broadcast %cst_51 : f32 to vector<1x32xf32>
    %185 = arith.divf %183, %184 : vector<1x32xf32>
    %186 = vector.broadcast %178 : vector<1x32xf32> to vector<8x32xf32>
    %187 = arith.subf %174, %186 : vector<8x32xf32>
    %cst_52 = arith.constant 9.99999974E-6 : f32
    %188 = vector.broadcast %cst_52 : f32 to vector<1x32xf32>
    %189 = arith.addf %185, %188 : vector<1x32xf32>
    %190 = math.rsqrt %189 : vector<1x32xf32>
    %191 = vector.broadcast %190 : vector<1x32xf32> to vector<8x32xf32>
    %192 = arith.mulf %187, %191 : vector<8x32xf32>
    %193 = tpu.concatenate %173, %192 in 0 : vector<8x32xf32>, vector<8x32xf32> -> vector<16x32xf32>
    %194 = vector.broadcast %10 : vector<1x32xf32> to vector<16x32xf32>
    %195 = arith.mulf %194, %193 : vector<16x32xf32>
    %196 = vector.broadcast %11 : vector<1x32xf32> to vector<16x32xf32>
    %197 = arith.addf %195, %196 : vector<16x32xf32>
    %c0_53 = arith.constant 0 : index
    %c0_54 = arith.constant 0 : index
    %198 = vector.load %arg2[%c0_53, %c0_54] : memref<16x32xf32, #tpu.memory_space<vmem>>, vector<16x32xf32>
    tpu.vector_store %arg2[%c0_53, %c0_54], %197 {strides = array<i32>} : memref<16x32xf32, #tpu.memory_space<vmem>>, vector<16x32xf32>,
    return
  }
}

</mosaic_0001>

<llo_original>
// kernel: encoder_layer.1
$region0: #{encoder_layer.1}
  #allocation0 [shape = 'u32[]', space=smem, size = 0x4, offset = 0x4, fixed_abs, tag = 'smem constant byte address 0x4 - core index']
  #allocation1 [shape = 'u32[144,128]{1,0:T(1,128)}', space=vmem, size = 0x12000, scoped, tag = 'internal scratch']
  %s0 = inlined_call_operand.hbm [shape: f32[16,32], index: 0, kind: input, shape index: {}]
  %s1 = inlined_call_operand.hbm [shape: f32[40,256], index: 1, kind: input, shape index: {}]
  %s2 = inlined_call_operand.hbm [shape: f32[16,32], index: 2, kind: output, shape index: {}]
  %s3 = sld [smem:[#allocation0]]
  $region26: #{encoder_layer.1} parent=0
    _
  %s5 = ssub.s32 1, %s3
  %s6 = scalar_select 0, %s5, %s3
  $region1: #{encoder_layer.1} parent=0
    #allocation2 [shape = 'u8[8192]{0}', space=vmem, size = 0x2000, scoped, tag = 'input window, operand 0, single buffered']
    #allocation3 [shape = 's32[1]{0}', space=sflag, size = 0x4, scoped, tag = 'scoped memory for encoder_layer.1']
    #allocation4 [shape = 's32[1]{0}', space=sflag, size = 0x4, scoped, tag = 'scoped memory for encoder_layer.1']
    #allocation5 [shape = 'u8[40960]{0}', space=vmem, size = 0xa000, scoped, tag = 'input window, operand 1, single buffered']
    #allocation6 [shape = 's32[1]{0}', space=sflag, size = 0x4, scoped, tag = 'scoped memory for encoder_layer.1']
    #allocation7 [shape = 'u8[8192]{0}', space=vmem, size = 0x2000, scoped, tag = 'output window, operand 0, single buffered']
    %7 = vsyncpa [#allocation3], 0
    %8 = vsyncpa [#allocation6], 0
    %9 = vsyncpa [#allocation4], 0
    // Predicated region
    $region2: #{encoder_layer.1} parent=1 // pred_check
      _
    $region3: #{encoder_layer.1} parent=1 // pred_check_branch
      %11 = sbr.rel (0) target = $region5
    $region4: #{encoder_layer.1} parent=1 // pred_region
      %s13 = ssub.s32 256, 256
      %14 = vsyncadd [#allocation3], %s13
      %s15 = sshll.u32 [#allocation2], 4
      %s16 = int_to_ptr.vmem [resolvable:$true] %s15
      %21 = dma.hbm_to_vmem [thread:$0]  %s0, 256, %s16, [#allocation3], 128, 128, 8
    $region5: #{encoder_layer.1} parent=1 // pred_fallthru
      _
    // Predicated region
    $region6: #{encoder_layer.1} parent=1 // pred_check
      _
    $region7: #{encoder_layer.1} parent=1 // pred_check_branch
      %23 = sbr.rel (0) target = $region9
    $region8: #{encoder_layer.1} parent=1 // pred_region
      %s25 = ssub.s32 1280, 1280
      %26 = vsyncadd [#allocation6], %s25
      %s27 = sshll.u32 [#allocation5], 4
      %s28 = int_to_ptr.vmem [resolvable:$true] %s27
      %33 = dma.hbm_to_vmem [thread:$0]  %s1, 1280, %s28, [#allocation6], 256, 256, 16
    $region9: #{encoder_layer.1} parent=1 // pred_fallthru
      _
    // Predicated region
    $region10: #{encoder_layer.1} parent=1 // pred_check
      _
    $region11: #{encoder_layer.1} parent=1 // pred_check_branch
      %35 = sbr.rel (0) target = $region13
    $region12: #{encoder_layer.1} parent=1 // pred_region
      %36 = dma.done [#allocation3], 256
    $region13: #{encoder_layer.1} parent=1 // pred_fallthru
      _
    // Predicated region
    $region14: #{encoder_layer.1} parent=1 // pred_check
      _
    $region15: #{encoder_layer.1} parent=1 // pred_check_branch
      %38 = sbr.rel (0) target = $region17
    $region16: #{encoder_layer.1} parent=1 // pred_region
      %39 = dma.done [#allocation6], 1280
    $region17: #{encoder_layer.1} parent=1 // pred_fallthru
      _
    %v40 = vld [vmem:[#allocation2] sm:$0xff]
    %v41 = vld [vmem:[#allocation2 + $0x8] sm:$0xff]
    %v42 = vld [vmem:[#allocation5] sm:$0xff]
    %v43 = vld [vmem:[#allocation5 + $0x10] sm:$0xff]
    %v44 = vld [vmem:[#allocation5 + $0x20] sm:$0xff]
    %v45 = vld [vmem:[#allocation5 + $0x30] sm:$0xff]
    %v46 = vld [vmem:[#allocation5 + $0x8] sm:$0xff]
    %v47 = vld [vmem:[#allocation5 + $0x18] sm:$0xff]
    %v48 = vld [vmem:[#allocation5 + $0x28] sm:$0xff]
    %v49 = vld [vmem:[#allocation5 + $0x38] sm:$0xff]
    %v50 = vld [vmem:[#allocation5 + $0x40] sm:$0xff]
    %vm51 = vcmask 261120
    %v53 = vsel %vm51, %v40, 0
    %v56 = vsel %vm51, %v41, 0
    %58 = vmatprep.subr.mxu0 0.0
    %59 = vmatpush1.msra.mxu0 0.0
    %60 = vmatprep.subr.mxu0 0.0
    %61 = vmatpush1.msra.mxu0 0.0
    %62 = vmatprep.subr.mxu0 0.0
    %63 = vmatpush1.msra.mxu0 0.0
    %64 = vmatprep.subr.mxu0 0.0
    %65 = vmatpush1.msra.mxu0 0.0
    %66 = vmatprep.subr.mxu0 0.0
    %67 = vmatpush1.msra.mxu0 0.0
    %68 = vmatprep.subr.mxu0 0.0
    %69 = vmatpush1.msra.mxu0 0.0
    %70 = vmatprep.subr.mxu0 0.0
    %71 = vmatpush1.msra.mxu0 0.0
    %72 = vmatprep.subr.mxu0 0.0
    %73 = vmatpush1.msra.mxu0 0.0
    %74 = vmatprep.subr.mxu0 0.0
    %75 = vmatpush1.msra.mxu0 0.0
    %76 = vmatprep.subr.mxu0 0.0
    %77 = vmatpush1.msra.mxu0 0.0
    %78 = vmatprep.subr.mxu0 0.0
    %79 = vmatpush1.msra.mxu0 0.0
    %80 = vmatprep.subr.mxu0 0.0
    %81 = vmatpush1.msra.mxu0 0.0
    %82 = vmatprep.subr.mxu0 0.0
    %83 = vmatpush1.msra.mxu0 %v45
    %84 = vmatprep.subr.mxu0 0.0
    %85 = vmatpush1.msra.mxu0 %v44
    %86 = vmatprep.subr.mxu0 0.0
    %87 = vmatpush1.msra.mxu0 %v43
    %88 = vmatprep.subr.mxu0 0.0
    %89 = vmatpush1.msra.mxu0 %v42
    %90 = vmatprep.subr.mxu0 0.0
    %91 = vmatpush2.msra.mxu0 0.0
    %92 = vmatprep.subr.mxu0 0.0
    %93 = vmatpush2.msra.mxu0 0.0
    %94 = vmatprep.subr.mxu0 0.0
    %95 = vmatpush2.msra.mxu0 0.0
    %96 = vmatprep.subr.mxu0 0.0
    %97 = vmatpush2.msra.mxu0 0.0
    %98 = vmatprep.subr.mxu0 0.0
    %99 = vmatpush2.msra.mxu0 0.0
    %100 = vmatprep.subr.mxu0 0.0
    %101 = vmatpush2.msra.mxu0 0.0
    %102 = vmatprep.subr.mxu0 0.0
    %103 = vmatpush2.msra.mxu0 0.0
    %104 = vmatprep.subr.mxu0 0.0
    %105 = vmatpush2.msra.mxu0 0.0
    %106 = vmatprep.subr.mxu0 0.0
    %107 = vmatpush2.msra.mxu0 0.0
    %108 = vmatprep.subr.mxu0 0.0
    %109 = vmatpush2.msra.mxu0 0.0
    %110 = vmatprep.subr.mxu0 0.0
    %111 = vmatpush2.msra.mxu0 0.0
    %112 = vmatprep.subr.mxu0 0.0
    %113 = vmatpush2.msra.mxu0 0.0
    %114 = vmatprep.subr.mxu0 0.0
    %115 = vmatpush2.msra.mxu0 0.0
    %116 = vmatprep.subr.mxu0 0.0
    %117 = vmatpush2.msra.mxu0 0.0
    %118 = vmatprep.subr.mxu0 0.0
    %119 = vmatpush2.msra.mxu0 0.0
    %120 = vmatprep.subr.mxu0 0.0
    %121 = vmatpush2.msra.mxu0 0.0
    %122 = vmatprep.mubr.f32.mxu0 0.0
    %123 = vmatmul.mubr.f32.gmra.mxu0 %v53
    %v124 = vpop.f32.mrf.mxu0
    %v125 = vadd.f32 0.0, %v124
    %v126 = vpop.f32.mrf.mxu0
    %127 = vmatprep.mubr.f32.mxu0 0.0
    %128 = vmatmul.mubr.f32.gmra.mxu0 %v56
    %v129 = vpop.f32.mrf.mxu0
    %v130 = vadd.f32 0.0, %v129
    %v131 = vpop.f32.mrf.mxu0
    %132 = vdwg.mxu0
    %134 = vrot.lane.b32.xlu0 %v125, 96
    %v135 = vpop.permute.xlu0 %134
    %vm136 = vcmask 64512
    %v137 = vsel %vm136, %v125, 0
    %v139 = vsel %vm136, %v135, 0
    %141 = vmatprep.subr.mxu0 0.0
    %142 = vmatpush1.xpose.msra.mxu0 0.0
    %143 = vmatprep.subr.mxu0 0.0
    %144 = vmatpush1.xpose.msra.mxu0 0.0
    %145 = vmatprep.subr.mxu0 0.0
    %146 = vmatpush1.xpose.msra.mxu0 0.0
    %147 = vmatprep.subr.mxu0 0.0
    %148 = vmatpush1.xpose.msra.mxu0 0.0
    %149 = vmatprep.subr.mxu0 0.0
    %150 = vmatpush1.xpose.msra.mxu0 0.0
    %151 = vmatprep.subr.mxu0 0.0
    %152 = vmatpush1.xpose.msra.mxu0 0.0
    %153 = vmatprep.subr.mxu0 0.0
    %154 = vmatpush1.xpose.msra.mxu0 0.0
    %155 = vmatprep.subr.mxu0 0.0
    %156 = vmatpush1.xpose.msra.mxu0 0.0
    %157 = vmatprep.subr.mxu0 0.0
    %158 = vmatpush1.xpose.msra.mxu0 0.0
    %159 = vmatprep.subr.mxu0 0.0
    %160 = vmatpush1.xpose.msra.mxu0 0.0
    %161 = vmatprep.subr.mxu0 0.0
    %162 = vmatpush1.xpose.msra.mxu0 0.0
    %163 = vmatprep.subr.mxu0 0.0
    %164 = vmatpush1.xpose.msra.mxu0 0.0
    %165 = vmatprep.subr.mxu0 0.0
    %166 = vmatpush1.xpose.msra.mxu0 0.0
    %167 = vmatprep.subr.mxu0 0.0
    %168 = vmatpush1.xpose.msra.mxu0 0.0
    %169 = vmatprep.subr.mxu0 0.0
    %170 = vmatpush1.xpose.msra.mxu0 0.0
    %171 = vmatprep.subr.mxu0 0.0
    %172 = vmatpush1.xpose.msra.mxu0 %v139
    %173 = vmatprep.subr.mxu0 0.0
    %174 = vmatpush2.xpose.msra.mxu0 0.0
    %175 = vmatprep.subr.mxu0 0.0
    %176 = vmatpush2.xpose.msra.mxu0 0.0
    %177 = vmatprep.subr.mxu0 0.0
    %178 = vmatpush2.xpose.msra.mxu0 0.0
    %179 = vmatprep.subr.mxu0 0.0
    %180 = vmatpush2.xpose.msra.mxu0 0.0
    %181 = vmatprep.subr.mxu0 0.0
    %182 = vmatpush2.xpose.msra.mxu0 0.0
    %183 = vmatprep.subr.mxu0 0.0
    %184 = vmatpush2.xpose.msra.mxu0 0.0
    %185 = vmatprep.subr.mxu0 0.0
    %186 = vmatpush2.xpose.msra.mxu0 0.0
    %187 = vmatprep.subr.mxu0 0.0
    %188 = vmatpush2.xpose.msra.mxu0 0.0
    %189 = vmatprep.subr.mxu0 0.0
    %190 = vmatpush2.xpose.msra.mxu0 0.0
    %191 = vmatprep.subr.mxu0 0.0
    %192 = vmatpush2.xpose.msra.mxu0 0.0
    %193 = vmatprep.subr.mxu0 0.0
    %194 = vmatpush2.xpose.msra.mxu0 0.0
    %195 = vmatprep.subr.mxu0 0.0
    %196 = vmatpush2.xpose.msra.mxu0 0.0
    %197 = vmatprep.subr.mxu0 0.0
    %198 = vmatpush2.xpose.msra.mxu0 0.0
    %199 = vmatprep.subr.mxu0 0.0
    %200 = vmatpush2.xpose.msra.mxu0 0.0
    %201 = vmatprep.subr.mxu0 0.0
    %202 = vmatpush2.xpose.msra.mxu0 0.0
    %203 = vmatprep.subr.mxu0 0.0
    %204 = vmatpush2.xpose.msra.mxu0 0.0
    %205 = vmatprep.mubr.f32.mxu0 0.0
    %206 = vmatmul.mubr.f32.gmra.mxu0 %v137
    %v207 = vpop.f32.mrf.mxu0
    %v208 = vadd.f32 0.0, %v207
    %v209 = vpop.f32.mrf.mxu0
    %210 = vdwg.mxu0
    %212 = vrot.lane.b32.xlu0 %v130, 96
    %v213 = vpop.permute.xlu0 %212
    %v214 = vsel %vm136, %v130, 0
    %v216 = vsel %vm136, %v213, 0
    %218 = vmatprep.subr.mxu0 0.0
    %219 = vmatpush1.xpose.msra.mxu0 0.0
    %220 = vmatprep.subr.mxu0 0.0
    %221 = vmatpush1.xpose.msra.mxu0 0.0
    %222 = vmatprep.subr.mxu0 0.0
    %223 = vmatpush1.xpose.msra.mxu0 0.0
    %224 = vmatprep.subr.mxu0 0.0
    %225 = vmatpush1.xpose.msra.mxu0 0.0
    %226 = vmatprep.subr.mxu0 0.0
    %227 = vmatpush1.xpose.msra.mxu0 0.0
    %228 = vmatprep.subr.mxu0 0.0
    %229 = vmatpush1.xpose.msra.mxu0 0.0
    %230 = vmatprep.subr.mxu0 0.0
    %231 = vmatpush1.xpose.msra.mxu0 0.0
    %232 = vmatprep.subr.mxu0 0.0
    %233 = vmatpush1.xpose.msra.mxu0 0.0
    %234 = vmatprep.subr.mxu0 0.0
    %235 = vmatpush1.xpose.msra.mxu0 0.0
    %236 = vmatprep.subr.mxu0 0.0
    %237 = vmatpush1.xpose.msra.mxu0 0.0
    %238 = vmatprep.subr.mxu0 0.0
    %239 = vmatpush1.xpose.msra.mxu0 0.0
    %240 = vmatprep.subr.mxu0 0.0
    %241 = vmatpush1.xpose.msra.mxu0 0.0
    %242 = vmatprep.subr.mxu0 0.0
    %243 = vmatpush1.xpose.msra.mxu0 0.0
    %244 = vmatprep.subr.mxu0 0.0
    %245 = vmatpush1.xpose.msra.mxu0 0.0
    %246 = vmatprep.subr.mxu0 0.0
    %247 = vmatpush1.xpose.msra.mxu0 0.0
    %248 = vmatprep.subr.mxu0 0.0
    %249 = vmatpush1.xpose.msra.mxu0 %v216
    %250 = vmatprep.subr.mxu0 0.0
    %251 = vmatpush2.xpose.msra.mxu0 0.0
    %252 = vmatprep.subr.mxu0 0.0
    %253 = vmatpush2.xpose.msra.mxu0 0.0
    %254 = vmatprep.subr.mxu0 0.0
    %255 = vmatpush2.xpose.msra.mxu0 0.0
    %256 = vmatprep.subr.mxu0 0.0
    %257 = vmatpush2.xpose.msra.mxu0 0.0
    %258 = vmatprep.subr.mxu0 0.0
    %259 = vmatpush2.xpose.msra.mxu0 0.0
    %260 = vmatprep.subr.mxu0 0.0
    %261 = vmatpush2.xpose.msra.mxu0 0.0
    %262 = vmatprep.subr.mxu0 0.0
    %263 = vmatpush2.xpose.msra.mxu0 0.0
    %264 = vmatprep.subr.mxu0 0.0
    %265 = vmatpush2.xpose.msra.mxu0 0.0
    %266 = vmatprep.subr.mxu0 0.0
    %267 = vmatpush2.xpose.msra.mxu0 0.0
    %268 = vmatprep.subr.mxu0 0.0
    %269 = vmatpush2.xpose.msra.mxu0 0.0
    %270 = vmatprep.subr.mxu0 0.0
    %271 = vmatpush2.xpose.msra.mxu0 0.0
    %272 = vmatprep.subr.mxu0 0.0
    %273 = vmatpush2.xpose.msra.mxu0 0.0
    %274 = vmatprep.subr.mxu0 0.0
    %275 = vmatpush2.xpose.msra.mxu0 0.0
    %276 = vmatprep.subr.mxu0 0.0
    %277 = vmatpush2.xpose.msra.mxu0 0.0
    %278 = vmatprep.subr.mxu0 0.0
    %279 = vmatpush2.xpose.msra.mxu0 0.0
    %280 = vmatprep.subr.mxu0 0.0
    %281 = vmatpush2.xpose.msra.mxu0 0.0
    %282 = vmatprep.mubr.f32.mxu0 0.0
    %283 = vmatmul.mubr.f32.gmra.mxu0 %v214
    %v284 = vpop.f32.mrf.mxu0
    %v285 = vadd.f32 0.0, %v284
    %v286 = vpop.f32.mrf.mxu0
    %287 = vdwg.mxu0
    %v288 = vmul.f32 %v208, 1.442695
    %v289 = vpow.pop %v288
    %v290 = vmul.f32 %v285, 1.442695
    %v291 = vpow.pop %v290
    %v292 = vsel %vm136, %v289, 0.0
    %293 = vadd.xlane.f32.xlu0 %v292
    %v294 = vpop.xlane.xlu0 %293
    %v295 = vsel %vm136, %v291, 0.0
    %296 = vadd.xlane.f32.xlu0 %v295
    %v297 = vpop.xlane.xlu0 %296
    %v298 = vrcp.pop %v294
    %v299 = vrcp.pop %v297
    %v300 = vmul.f32 %v294, %v298
    %v301 = vmul.f32 %v297, %v299
    %v302 = vsub.f32 2.0, %v300
    %v303 = vsub.f32 2.0, %v301
    %v304 = vmul.f32 %v298, %v302
    %v305 = vmul.f32 %v299, %v303
    %v306 = vmul.f32 %v289, %v304
    %v307 = vmul.f32 %v291, %v305
    %308 = vrot.lane.b32.xlu0 %v125, 64
    %v309 = vpop.permute.xlu0 %308
    %v312 = vsel %vm136, %v306, 0
    %314 = vmatprep.subr.mxu0 0.0
    %315 = vmatpush1.msra.mxu0 0.0
    %316 = vmatprep.subr.mxu0 0.0
    %317 = vmatpush1.msra.mxu0 0.0
    %318 = vmatprep.subr.mxu0 0.0
    %319 = vmatpush1.msra.mxu0 0.0
    %320 = vmatprep.subr.mxu0 0.0
    %321 = vmatpush1.msra.mxu0 0.0
    %322 = vmatprep.subr.mxu0 0.0
    %323 = vmatpush1.msra.mxu0 0.0
    %324 = vmatprep.subr.mxu0 0.0
    %325 = vmatpush1.msra.mxu0 0.0
    %326 = vmatprep.subr.mxu0 0.0
    %327 = vmatpush1.msra.mxu0 0.0
    %328 = vmatprep.subr.mxu0 0.0
    %329 = vmatpush1.msra.mxu0 0.0
    %330 = vmatprep.subr.mxu0 0.0
    %331 = vmatpush1.msra.mxu0 0.0
    %332 = vmatprep.subr.mxu0 0.0
    %333 = vmatpush1.msra.mxu0 0.0
    %334 = vmatprep.subr.mxu0 0.0
    %335 = vmatpush1.msra.mxu0 0.0
    %336 = vmatprep.subr.mxu0 0.0
    %337 = vmatpush1.msra.mxu0 0.0
    %338 = vmatprep.subr.mxu0 0.0
    %339 = vmatpush1.msra.mxu0 0.0
    %340 = vmatprep.subr.mxu0 0.0
    %341 = vmatpush1.msra.mxu0 0.0
    %342 = vmatprep.subr.mxu0 0.0
    %343 = vmatpush1.msra.mxu0 0.0
    %344 = vmatprep.subr.mxu0 0.0
    %345 = vmatpush1.msra.mxu0 %v309
    %346 = vmatprep.subr.mxu0 0.0
    %347 = vmatpush2.msra.mxu0 0.0
    %348 = vmatprep.subr.mxu0 0.0
    %349 = vmatpush2.msra.mxu0 0.0
    %350 = vmatprep.subr.mxu0 0.0
    %351 = vmatpush2.msra.mxu0 0.0
    %352 = vmatprep.subr.mxu0 0.0
    %353 = vmatpush2.msra.mxu0 0.0
    %354 = vmatprep.subr.mxu0 0.0
    %355 = vmatpush2.msra.mxu0 0.0
    %356 = vmatprep.subr.mxu0 0.0
    %357 = vmatpush2.msra.mxu0 0.0
    %358 = vmatprep.subr.mxu0 0.0
    %359 = vmatpush2.msra.mxu0 0.0
    %360 = vmatprep.subr.mxu0 0.0
    %361 = vmatpush2.msra.mxu0 0.0
    %362 = vmatprep.subr.mxu0 0.0
    %363 = vmatpush2.msra.mxu0 0.0
    %364 = vmatprep.subr.mxu0 0.0
    %365 = vmatpush2.msra.mxu0 0.0
    %366 = vmatprep.subr.mxu0 0.0
    %367 = vmatpush2.msra.mxu0 0.0
    %368 = vmatprep.subr.mxu0 0.0
    %369 = vmatpush2.msra.mxu0 0.0
    %370 = vmatprep.subr.mxu0 0.0
    %371 = vmatpush2.msra.mxu0 0.0
    %372 = vmatprep.subr.mxu0 0.0
    %373 = vmatpush2.msra.mxu0 0.0
    %374 = vmatprep.subr.mxu0 0.0
    %375 = vmatpush2.msra.mxu0 0.0
    %376 = vmatprep.subr.mxu0 0.0
    %377 = vmatpush2.msra.mxu0 0.0
    %378 = vmatprep.mubr.f32.mxu0 0.0
    %379 = vmatmul.mubr.f32.gmra.mxu0 %v312
    %v380 = vpop.f32.mrf.mxu0
    %v381 = vadd.f32 0.0, %v380
    %v382 = vpop.f32.mrf.mxu0
    %383 = vdwg.mxu0
    %384 = vrot.lane.b32.xlu0 %v130, 64
    %v385 = vpop.permute.xlu0 %384
    %v388 = vsel %vm136, %v307, 0
    %390 = vmatprep.subr.mxu0 0.0
    %391 = vmatpush1.msra.mxu0 0.0
    %392 = vmatprep.subr.mxu0 0.0
    %393 = vmatpush1.msra.mxu0 0.0
    %394 = vmatprep.subr.mxu0 0.0
    %395 = vmatpush1.msra.mxu0 0.0
    %396 = vmatprep.subr.mxu0 0.0
    %397 = vmatpush1.msra.mxu0 0.0
    %398 = vmatprep.subr.mxu0 0.0
    %399 = vmatpush1.msra.mxu0 0.0
    %400 = vmatprep.subr.mxu0 0.0
    %401 = vmatpush1.msra.mxu0 0.0
    %402 = vmatprep.subr.mxu0 0.0
    %403 = vmatpush1.msra.mxu0 0.0
    %404 = vmatprep.subr.mxu0 0.0
    %405 = vmatpush1.msra.mxu0 0.0
    %406 = vmatprep.subr.mxu0 0.0
    %407 = vmatpush1.msra.mxu0 0.0
    %408 = vmatprep.subr.mxu0 0.0
    %409 = vmatpush1.msra.mxu0 0.0
    %410 = vmatprep.subr.mxu0 0.0
    %411 = vmatpush1.msra.mxu0 0.0
    %412 = vmatprep.subr.mxu0 0.0
    %413 = vmatpush1.msra.mxu0 0.0
    %414 = vmatprep.subr.mxu0 0.0
    %415 = vmatpush1.msra.mxu0 0.0
    %416 = vmatprep.subr.mxu0 0.0
    %417 = vmatpush1.msra.mxu0 0.0
    %418 = vmatprep.subr.mxu0 0.0
    %419 = vmatpush1.msra.mxu0 0.0
    %420 = vmatprep.subr.mxu0 0.0
    %421 = vmatpush1.msra.mxu0 %v385
    %422 = vmatprep.subr.mxu0 0.0
    %423 = vmatpush2.msra.mxu0 0.0
    %424 = vmatprep.subr.mxu0 0.0
    %425 = vmatpush2.msra.mxu0 0.0
    %426 = vmatprep.subr.mxu0 0.0
    %427 = vmatpush2.msra.mxu0 0.0
    %428 = vmatprep.subr.mxu0 0.0
    %429 = vmatpush2.msra.mxu0 0.0
    %430 = vmatprep.subr.mxu0 0.0
    %431 = vmatpush2.msra.mxu0 0.0
    %432 = vmatprep.subr.mxu0 0.0
    %433 = vmatpush2.msra.mxu0 0.0
    %434 = vmatprep.subr.mxu0 0.0
    %435 = vmatpush2.msra.mxu0 0.0
    %436 = vmatprep.subr.mxu0 0.0
    %437 = vmatpush2.msra.mxu0 0.0
    %438 = vmatprep.subr.mxu0 0.0
    %439 = vmatpush2.msra.mxu0 0.0
    %440 = vmatprep.subr.mxu0 0.0
    %441 = vmatpush2.msra.mxu0 0.0
    %442 = vmatprep.subr.mxu0 0.0
    %443 = vmatpush2.msra.mxu0 0.0
    %444 = vmatprep.subr.mxu0 0.0
    %445 = vmatpush2.msra.mxu0 0.0
    %446 = vmatprep.subr.mxu0 0.0
    %447 = vmatpush2.msra.mxu0 0.0
    %448 = vmatprep.subr.mxu0 0.0
    %449 = vmatpush2.msra.mxu0 0.0
    %450 = vmatprep.subr.mxu0 0.0
    %451 = vmatpush2.msra.mxu0 0.0
    %452 = vmatprep.subr.mxu0 0.0
    %453 = vmatpush2.msra.mxu0 0.0
    %454 = vmatprep.mubr.f32.mxu0 0.0
    %455 = vmatmul.mubr.f32.gmra.mxu0 %v388
    %v456 = vpop.f32.mrf.mxu0
    %v457 = vadd.f32 0.0, %v456
    %v458 = vpop.f32.mrf.mxu0
    %459 = vdwg.mxu0
    %v460 = vld [vmem:[#allocation5] sm:$0xff]
    %462 = vrot.lane.b32.xlu0 %v460, 32
    %v463 = vpop.permute.xlu0 %462
    %v466 = vsel %vm136, %v381, 0
    %v469 = vsel %vm136, %v457, 0
    %471 = vmatprep.subr.mxu0 0.0
    %472 = vmatpush1.msra.mxu0 0.0
    %473 = vmatprep.subr.mxu0 0.0
    %474 = vmatpush1.msra.mxu0 0.0
    %475 = vmatprep.subr.mxu0 0.0
    %476 = vmatpush1.msra.mxu0 0.0
    %477 = vmatprep.subr.mxu0 0.0
    %478 = vmatpush1.msra.mxu0 0.0
    %479 = vmatprep.subr.mxu0 0.0
    %480 = vmatpush1.msra.mxu0 0.0
    %481 = vmatprep.subr.mxu0 0.0
    %482 = vmatpush1.msra.mxu0 0.0
    %483 = vmatprep.subr.mxu0 0.0
    %484 = vmatpush1.msra.mxu0 0.0
    %485 = vmatprep.subr.mxu0 0.0
    %486 = vmatpush1.msra.mxu0 0.0
    %487 = vmatprep.subr.mxu0 0.0
    %488 = vmatpush1.msra.mxu0 0.0
    %489 = vmatprep.subr.mxu0 0.0
    %490 = vmatpush1.msra.mxu0 0.0
    %491 = vmatprep.subr.mxu0 0.0
    %492 = vmatpush1.msra.mxu0 0.0
    %493 = vmatprep.subr.mxu0 0.0
    %494 = vmatpush1.msra.mxu0 0.0
    %495 = vmatprep.subr.mxu0 0.0
    %496 = vmatpush1.msra.mxu0 0.0
    %497 = vmatprep.subr.mxu0 0.0
    %498 = vmatpush1.msra.mxu0 0.0
    %499 = vmatprep.subr.mxu0 0.0
    %500 = vmatpush1.msra.mxu0 0.0
    %501 = vmatprep.subr.mxu0 0.0
    %502 = vmatpush1.msra.mxu0 %v463
    %503 = vmatprep.subr.mxu0 0.0
    %504 = vmatpush2.msra.mxu0 0.0
    %505 = vmatprep.subr.mxu0 0.0
    %506 = vmatpush2.msra.mxu0 0.0
    %507 = vmatprep.subr.mxu0 0.0
    %508 = vmatpush2.msra.mxu0 0.0
    %509 = vmatprep.subr.mxu0 0.0
    %510 = vmatpush2.msra.mxu0 0.0
    %511 = vmatprep.subr.mxu0 0.0
    %512 = vmatpush2.msra.mxu0 0.0
    %513 = vmatprep.subr.mxu0 0.0
    %514 = vmatpush2.msra.mxu0 0.0
    %515 = vmatprep.subr.mxu0 0.0
    %516 = vmatpush2.msra.mxu0 0.0
    %517 = vmatprep.subr.mxu0 0.0
    %518 = vmatpush2.msra.mxu0 0.0
    %519 = vmatprep.subr.mxu0 0.0
    %520 = vmatpush2.msra.mxu0 0.0
    %521 = vmatprep.subr.mxu0 0.0
    %522 = vmatpush2.msra.mxu0 0.0
    %523 = vmatprep.subr.mxu0 0.0
    %524 = vmatpush2.msra.mxu0 0.0
    %525 = vmatprep.subr.mxu0 0.0
    %526 = vmatpush2.msra.mxu0 0.0
    %527 = vmatprep.subr.mxu0 0.0
    %528 = vmatpush2.msra.mxu0 0.0
    %529 = vmatprep.subr.mxu0 0.0
    %530 = vmatpush2.msra.mxu0 0.0
    %531 = vmatprep.subr.mxu0 0.0
    %532 = vmatpush2.msra.mxu0 0.0
    %533 = vmatprep.subr.mxu0 0.0
    %534 = vmatpush2.msra.mxu0 0.0
    %535 = vmatprep.mubr.f32.mxu0 0.0
    %536 = vmatmul.mubr.f32.gmra.mxu0 %v466
    %v537 = vpop.f32.mrf.mxu0
    %v538 = vadd.f32 0.0, %v537
    %v539 = vpop.f32.mrf.mxu0
    %540 = vmatprep.mubr.f32.mxu0 0.0
    %541 = vmatmul.mubr.f32.gmra.mxu0 %v469
    %v542 = vpop.f32.mrf.mxu0
    %v543 = vadd.f32 0.0, %v542
    %v544 = vpop.f32.mrf.mxu0
    %545 = vdwg.mxu0
    %v546 = vlaneseq
    %v547 = vshrl.u32 %v546, 7
    %v548 = vsub.s32 0, %v547
    %v549 = vrot.slane %v50, %v548
    %v550 = vadd.f32 %v549, %v538
    %v551 = vadd.f32 %v549, %v543
    %552 = vrot.lane.b32.xlu0 %v125, 120
    %v553 = vpop.permute.xlu0 %552
    %554 = vrot.lane.b32.xlu0 %v125, 88
    %v555 = vpop.permute.xlu0 %554
    %v556 = vsel %vm136, %v553, 0
    %v558 = vsel %vm136, %v555, 0
    %560 = vmatprep.subr.mxu0 0.0
    %561 = vmatpush1.xpose.msra.mxu0 0.0
    %562 = vmatprep.subr.mxu0 0.0
    %563 = vmatpush1.xpose.msra.mxu0 0.0
    %564 = vmatprep.subr.mxu0 0.0
    %565 = vmatpush1.xpose.msra.mxu0 0.0
    %566 = vmatprep.subr.mxu0 0.0
    %567 = vmatpush1.xpose.msra.mxu0 0.0
    %568 = vmatprep.subr.mxu0 0.0
    %569 = vmatpush1.xpose.msra.mxu0 0.0
    %570 = vmatprep.subr.mxu0 0.0
    %571 = vmatpush1.xpose.msra.mxu0 0.0
    %572 = vmatprep.subr.mxu0 0.0
    %573 = vmatpush1.xpose.msra.mxu0 0.0
    %574 = vmatprep.subr.mxu0 0.0
    %575 = vmatpush1.xpose.msra.mxu0 0.0
    %576 = vmatprep.subr.mxu0 0.0
    %577 = vmatpush1.xpose.msra.mxu0 0.0
    %578 = vmatprep.subr.mxu0 0.0
    %579 = vmatpush1.xpose.msra.mxu0 0.0
    %580 = vmatprep.subr.mxu0 0.0
    %581 = vmatpush1.xpose.msra.mxu0 0.0
    %582 = vmatprep.subr.mxu0 0.0
    %583 = vmatpush1.xpose.msra.mxu0 0.0
    %584 = vmatprep.subr.mxu0 0.0
    %585 = vmatpush1.xpose.msra.mxu0 0.0
    %586 = vmatprep.subr.mxu0 0.0
    %587 = vmatpush1.xpose.msra.mxu0 0.0
    %588 = vmatprep.subr.mxu0 0.0
    %589 = vmatpush1.xpose.msra.mxu0 0.0
    %590 = vmatprep.subr.mxu0 0.0
    %591 = vmatpush1.xpose.msra.mxu0 %v558
    %592 = vmatprep.subr.mxu0 0.0
    %593 = vmatpush2.xpose.msra.mxu0 0.0
    %594 = vmatprep.subr.mxu0 0.0
    %595 = vmatpush2.xpose.msra.mxu0 0.0
    %596 = vmatprep.subr.mxu0 0.0
    %597 = vmatpush2.xpose.msra.mxu0 0.0
    %598 = vmatprep.subr.mxu0 0.0
    %599 = vmatpush2.xpose.msra.mxu0 0.0
    %600 = vmatprep.subr.mxu0 0.0
    %601 = vmatpush2.xpose.msra.mxu0 0.0
    %602 = vmatprep.subr.mxu0 0.0
    %603 = vmatpush2.xpose.msra.mxu0 0.0
    %604 = vmatprep.subr.mxu0 0.0
    %605 = vmatpush2.xpose.msra.mxu0 0.0
    %606 = vmatprep.subr.mxu0 0.0
    %607 = vmatpush2.xpose.msra.mxu0 0.0
    %608 = vmatprep.subr.mxu0 0.0
    %609 = vmatpush2.xpose.msra.mxu0 0.0
    %610 = vmatprep.subr.mxu0 0.0
    %611 = vmatpush2.xpose.msra.mxu0 0.0
    %612 = vmatprep.subr.mxu0 0.0
    %613 = vmatpush2.xpose.msra.mxu0 0.0
    %614 = vmatprep.subr.mxu0 0.0
    %615 = vmatpush2.xpose.msra.mxu0 0.0
    %616 = vmatprep.subr.mxu0 0.0
    %617 = vmatpush2.xpose.msra.mxu0 0.0
    %618 = vmatprep.subr.mxu0 0.0
    %619 = vmatpush2.xpose.msra.mxu0 0.0
    %620 = vmatprep.subr.mxu0 0.0
    %621 = vmatpush2.xpose.msra.mxu0 0.0
    %622 = vmatprep.subr.mxu0 0.0
    %623 = vmatpush2.xpose.msra.mxu0 0.0
    %624 = vmatprep.mubr.f32.mxu0 0.0
    %625 = vmatmul.mubr.f32.gmra.mxu0 %v556
    %v626 = vpop.f32.mrf.mxu0
    %v627 = vadd.f32 0.0, %v626
    %v628 = vpop.f32.mrf.mxu0
    %629 = vdwg.mxu0
    %630 = vrot.lane.b32.xlu0 %v130, 120
    %v631 = vpop.permute.xlu0 %630
    %632 = vrot.lane.b32.xlu0 %v130, 88
    %v633 = vpop.permute.xlu0 %632
    %v634 = vsel %vm136, %v631, 0
    %v636 = vsel %vm136, %v633, 0
    %638 = vmatprep.subr.mxu0 0.0
    %639 = vmatpush1.xpose.msra.mxu0 0.0
    %640 = vmatprep.subr.mxu0 0.0
    %641 = vmatpush1.xpose.msra.mxu0 0.0
    %642 = vmatprep.subr.mxu0 0.0
    %643 = vmatpush1.xpose.msra.mxu0 0.0
    %644 = vmatprep.subr.mxu0 0.0
    %645 = vmatpush1.xpose.msra.mxu0 0.0
    %646 = vmatprep.subr.mxu0 0.0
    %647 = vmatpush1.xpose.msra.mxu0 0.0
    %648 = vmatprep.subr.mxu0 0.0
    %649 = vmatpush1.xpose.msra.mxu0 0.0
    %650 = vmatprep.subr.mxu0 0.0
    %651 = vmatpush1.xpose.msra.mxu0 0.0
    %652 = vmatprep.subr.mxu0 0.0
    %653 = vmatpush1.xpose.msra.mxu0 0.0
    %654 = vmatprep.subr.mxu0 0.0
    %655 = vmatpush1.xpose.msra.mxu0 0.0
    %656 = vmatprep.subr.mxu0 0.0
    %657 = vmatpush1.xpose.msra.mxu0 0.0
    %658 = vmatprep.subr.mxu0 0.0
    %659 = vmatpush1.xpose.msra.mxu0 0.0
    %660 = vmatprep.subr.mxu0 0.0
    %661 = vmatpush1.xpose.msra.mxu0 0.0
    %662 = vmatprep.subr.mxu0 0.0
    %663 = vmatpush1.xpose.msra.mxu0 0.0
    %664 = vmatprep.subr.mxu0 0.0
    %665 = vmatpush1.xpose.msra.mxu0 0.0
    %666 = vmatprep.subr.mxu0 0.0
    %667 = vmatpush1.xpose.msra.mxu0 0.0
    %668 = vmatprep.subr.mxu0 0.0
    %669 = vmatpush1.xpose.msra.mxu0 %v636
    %670 = vmatprep.subr.mxu0 0.0
    %671 = vmatpush2.xpose.msra.mxu0 0.0
    %672 = vmatprep.subr.mxu0 0.0
    %673 = vmatpush2.xpose.msra.mxu0 0.0
    %674 = vmatprep.subr.mxu0 0.0
    %675 = vmatpush2.xpose.msra.mxu0 0.0
    %676 = vmatprep.subr.mxu0 0.0
    %677 = vmatpush2.xpose.msra.mxu0 0.0
    %678 = vmatprep.subr.mxu0 0.0
    %679 = vmatpush2.xpose.msra.mxu0 0.0
    %680 = vmatprep.subr.mxu0 0.0
    %681 = vmatpush2.xpose.msra.mxu0 0.0
    %682 = vmatprep.subr.mxu0 0.0
    %683 = vmatpush2.xpose.msra.mxu0 0.0
    %684 = vmatprep.subr.mxu0 0.0
    %685 = vmatpush2.xpose.msra.mxu0 0.0
    %686 = vmatprep.subr.mxu0 0.0
    %687 = vmatpush2.xpose.msra.mxu0 0.0
    %688 = vmatprep.subr.mxu0 0.0
    %689 = vmatpush2.xpose.msra.mxu0 0.0
    %690 = vmatprep.subr.mxu0 0.0
    %691 = vmatpush2.xpose.msra.mxu0 0.0
    %692 = vmatprep.subr.mxu0 0.0
    %693 = vmatpush2.xpose.msra.mxu0 0.0
    %694 = vmatprep.subr.mxu0 0.0
    %695 = vmatpush2.xpose.msra.mxu0 0.0
    %696 = vmatprep.subr.mxu0 0.0
    %697 = vmatpush2.xpose.msra.mxu0 0.0
    %698 = vmatprep.subr.mxu0 0.0
    %699 = vmatpush2.xpose.msra.mxu0 0.0
    %700 = vmatprep.subr.mxu0 0.0
    %701 = vmatpush2.xpose.msra.mxu0 0.0
    %702 = vmatprep.mubr.f32.mxu0 0.0
    %703 = vmatmul.mubr.f32.gmra.mxu0 %v634
    %v704 = vpop.f32.mrf.mxu0
    %v705 = vadd.f32 0.0, %v704
    %v706 = vpop.f32.mrf.mxu0
    %707 = vdwg.mxu0
    %v708 = vmul.f32 %v627, 1.442695
    %v709 = vpow.pop %v708
    %v710 = vmul.f32 %v705, 1.442695
    %v711 = vpow.pop %v710
    %v712 = vsel %vm136, %v709, 0.0
    %713 = vadd.xlane.f32.xlu0 %v712
    %v714 = vpop.xlane.xlu0 %713
    %v715 = vsel %vm136, %v711, 0.0
    %716 = vadd.xlane.f32.xlu0 %v715
    %v717 = vpop.xlane.xlu0 %716
    %v718 = vrcp.pop %v714
    %v719 = vrcp.pop %v717
    %v720 = vmul.f32 %v714, %v718
    %v721 = vmul.f32 %v717, %v719
    %v722 = vsub.f32 2.0, %v720
    %v723 = vsub.f32 2.0, %v721
    %v724 = vmul.f32 %v718, %v722
    %v725 = vmul.f32 %v719, %v723
    %v726 = vmul.f32 %v709, %v724
    %v727 = vmul.f32 %v711, %v725
    %728 = vrot.lane.b32.xlu0 %v125, 56
    %v729 = vpop.permute.xlu0 %728
    %v732 = vsel %vm136, %v726, 0
    %734 = vmatprep.subr.mxu0 0.0
    %735 = vmatpush1.msra.mxu0 0.0
    %736 = vmatprep.subr.mxu0 0.0
    %737 = vmatpush1.msra.mxu0 0.0
    %738 = vmatprep.subr.mxu0 0.0
    %739 = vmatpush1.msra.mxu0 0.0
    %740 = vmatprep.subr.mxu0 0.0
    %741 = vmatpush1.msra.mxu0 0.0
    %742 = vmatprep.subr.mxu0 0.0
    %743 = vmatpush1.msra.mxu0 0.0
    %744 = vmatprep.subr.mxu0 0.0
    %745 = vmatpush1.msra.mxu0 0.0
    %746 = vmatprep.subr.mxu0 0.0
    %747 = vmatpush1.msra.mxu0 0.0
    %748 = vmatprep.subr.mxu0 0.0
    %749 = vmatpush1.msra.mxu0 0.0
    %750 = vmatprep.subr.mxu0 0.0
    %751 = vmatpush1.msra.mxu0 0.0
    %752 = vmatprep.subr.mxu0 0.0
    %753 = vmatpush1.msra.mxu0 0.0
    %754 = vmatprep.subr.mxu0 0.0
    %755 = vmatpush1.msra.mxu0 0.0
    %756 = vmatprep.subr.mxu0 0.0
    %757 = vmatpush1.msra.mxu0 0.0
    %758 = vmatprep.subr.mxu0 0.0
    %759 = vmatpush1.msra.mxu0 0.0
    %760 = vmatprep.subr.mxu0 0.0
    %761 = vmatpush1.msra.mxu0 0.0
    %762 = vmatprep.subr.mxu0 0.0
    %763 = vmatpush1.msra.mxu0 0.0
    %764 = vmatprep.subr.mxu0 0.0
    %765 = vmatpush1.msra.mxu0 %v729
    %766 = vmatprep.subr.mxu0 0.0
    %767 = vmatpush2.msra.mxu0 0.0
    %768 = vmatprep.subr.mxu0 0.0
    %769 = vmatpush2.msra.mxu0 0.0
    %770 = vmatprep.subr.mxu0 0.0
    %771 = vmatpush2.msra.mxu0 0.0
    %772 = vmatprep.subr.mxu0 0.0
    %773 = vmatpush2.msra.mxu0 0.0
    %774 = vmatprep.subr.mxu0 0.0
    %775 = vmatpush2.msra.mxu0 0.0
    %776 = vmatprep.subr.mxu0 0.0
    %777 = vmatpush2.msra.mxu0 0.0
    %778 = vmatprep.subr.mxu0 0.0
    %779 = vmatpush2.msra.mxu0 0.0
    %780 = vmatprep.subr.mxu0 0.0
    %781 = vmatpush2.msra.mxu0 0.0
    %782 = vmatprep.subr.mxu0 0.0
    %783 = vmatpush2.msra.mxu0 0.0
    %784 = vmatprep.subr.mxu0 0.0
    %785 = vmatpush2.msra.mxu0 0.0
    %786 = vmatprep.subr.mxu0 0.0
    %787 = vmatpush2.msra.mxu0 0.0
    %788 = vmatprep.subr.mxu0 0.0
    %789 = vmatpush2.msra.mxu0 0.0
    %790 = vmatprep.subr.mxu0 0.0
    %791 = vmatpush2.msra.mxu0 0.0
    %792 = vmatprep.subr.mxu0 0.0
    %793 = vmatpush2.msra.mxu0 0.0
    %794 = vmatprep.subr.mxu0 0.0
    %795 = vmatpush2.msra.mxu0 0.0
    %796 = vmatprep.subr.mxu0 0.0
    %797 = vmatpush2.msra.mxu0 0.0
    %798 = vmatprep.mubr.f32.mxu0 0.0
    %799 = vmatmul.mubr.f32.gmra.mxu0 %v732
    %v800 = vpop.f32.mrf.mxu0
    %v801 = vadd.f32 0.0, %v800
    %v802 = vpop.f32.mrf.mxu0
    %803 = vdwg.mxu0
    %804 = vrot.lane.b32.xlu0 %v130, 56
    %v805 = vpop.permute.xlu0 %804
    %v808 = vsel %vm136, %v727, 0
    %810 = vmatprep.subr.mxu0 0.0
    %811 = vmatpush1.msra.mxu0 0.0
    %812 = vmatprep.subr.mxu0 0.0
    %813 = vmatpush1.msra.mxu0 0.0
    %814 = vmatprep.subr.mxu0 0.0
    %815 = vmatpush1.msra.mxu0 0.0
    %816 = vmatprep.subr.mxu0 0.0
    %817 = vmatpush1.msra.mxu0 0.0
    %818 = vmatprep.subr.mxu0 0.0
    %819 = vmatpush1.msra.mxu0 0.0
    %820 = vmatprep.subr.mxu0 0.0
    %821 = vmatpush1.msra.mxu0 0.0
    %822 = vmatprep.subr.mxu0 0.0
    %823 = vmatpush1.msra.mxu0 0.0
    %824 = vmatprep.subr.mxu0 0.0
    %825 = vmatpush1.msra.mxu0 0.0
    %826 = vmatprep.subr.mxu0 0.0
    %827 = vmatpush1.msra.mxu0 0.0
    %828 = vmatprep.subr.mxu0 0.0
    %829 = vmatpush1.msra.mxu0 0.0
    %830 = vmatprep.subr.mxu0 0.0
    %831 = vmatpush1.msra.mxu0 0.0
    %832 = vmatprep.subr.mxu0 0.0
    %833 = vmatpush1.msra.mxu0 0.0
    %834 = vmatprep.subr.mxu0 0.0
    %835 = vmatpush1.msra.mxu0 0.0
    %836 = vmatprep.subr.mxu0 0.0
    %837 = vmatpush1.msra.mxu0 0.0
    %838 = vmatprep.subr.mxu0 0.0
    %839 = vmatpush1.msra.mxu0 0.0
    %840 = vmatprep.subr.mxu0 0.0
    %841 = vmatpush1.msra.mxu0 %v805
    %842 = vmatprep.subr.mxu0 0.0
    %843 = vmatpush2.msra.mxu0 0.0
    %844 = vmatprep.subr.mxu0 0.0
    %845 = vmatpush2.msra.mxu0 0.0
    %846 = vmatprep.subr.mxu0 0.0
    %847 = vmatpush2.msra.mxu0 0.0
    %848 = vmatprep.subr.mxu0 0.0
    %849 = vmatpush2.msra.mxu0 0.0
    %850 = vmatprep.subr.mxu0 0.0
    %851 = vmatpush2.msra.mxu0 0.0
    %852 = vmatprep.subr.mxu0 0.0
    %853 = vmatpush2.msra.mxu0 0.0
    %854 = vmatprep.subr.mxu0 0.0
    %855 = vmatpush2.msra.mxu0 0.0
    %856 = vmatprep.subr.mxu0 0.0
    %857 = vmatpush2.msra.mxu0 0.0
    %858 = vmatprep.subr.mxu0 0.0
    %859 = vmatpush2.msra.mxu0 0.0
    %860 = vmatprep.subr.mxu0 0.0
    %861 = vmatpush2.msra.mxu0 0.0
    %862 = vmatprep.subr.mxu0 0.0
    %863 = vmatpush2.msra.mxu0 0.0
    %864 = vmatprep.subr.mxu0 0.0
    %865 = vmatpush2.msra.mxu0 0.0
    %866 = vmatprep.subr.mxu0 0.0
    %867 = vmatpush2.msra.mxu0 0.0
    %868 = vmatprep.subr.mxu0 0.0
    %869 = vmatpush2.msra.mxu0 0.0
    %870 = vmatprep.subr.mxu0 0.0
    %871 = vmatpush2.msra.mxu0 0.0
    %872 = vmatprep.subr.mxu0 0.0
    %873 = vmatpush2.msra.mxu0 0.0
    %874 = vmatprep.mubr.f32.mxu0 0.0
    %875 = vmatmul.mubr.f32.gmra.mxu0 %v808
    %v876 = vpop.f32.mrf.mxu0
    %v877 = vadd.f32 0.0, %v876
    %v878 = vpop.f32.mrf.mxu0
    %879 = vdwg.mxu0
    %v880 = vld [vmem:[#allocation5 + $0x10] sm:$0xff]
    %882 = vrot.lane.b32.xlu0 %v880, 32
    %v883 = vpop.permute.xlu0 %882
    %v886 = vsel %vm136, %v801, 0
    %v889 = vsel %vm136, %v877, 0
    %891 = vmatprep.subr.mxu0 0.0
    %892 = vmatpush1.msra.mxu0 0.0
    %893 = vmatprep.subr.mxu0 0.0
    %894 = vmatpush1.msra.mxu0 0.0
    %895 = vmatprep.subr.mxu0 0.0
    %896 = vmatpush1.msra.mxu0 0.0
    %897 = vmatprep.subr.mxu0 0.0
    %898 = vmatpush1.msra.mxu0 0.0
    %899 = vmatprep.subr.mxu0 0.0
    %900 = vmatpush1.msra.mxu0 0.0
    %901 = vmatprep.subr.mxu0 0.0
    %902 = vmatpush1.msra.mxu0 0.0
    %903 = vmatprep.subr.mxu0 0.0
    %904 = vmatpush1.msra.mxu0 0.0
    %905 = vmatprep.subr.mxu0 0.0
    %906 = vmatpush1.msra.mxu0 0.0
    %907 = vmatprep.subr.mxu0 0.0
    %908 = vmatpush1.msra.mxu0 0.0
    %909 = vmatprep.subr.mxu0 0.0
    %910 = vmatpush1.msra.mxu0 0.0
    %911 = vmatprep.subr.mxu0 0.0
    %912 = vmatpush1.msra.mxu0 0.0
    %913 = vmatprep.subr.mxu0 0.0
    %914 = vmatpush1.msra.mxu0 0.0
    %915 = vmatprep.subr.mxu0 0.0
    %916 = vmatpush1.msra.mxu0 0.0
    %917 = vmatprep.subr.mxu0 0.0
    %918 = vmatpush1.msra.mxu0 0.0
    %919 = vmatprep.subr.mxu0 0.0
    %920 = vmatpush1.msra.mxu0 0.0
    %921 = vmatprep.subr.mxu0 0.0
    %922 = vmatpush1.msra.mxu0 %v883
    %923 = vmatprep.subr.mxu0 0.0
    %924 = vmatpush2.msra.mxu0 0.0
    %925 = vmatprep.subr.mxu0 0.0
    %926 = vmatpush2.msra.mxu0 0.0
    %927 = vmatprep.subr.mxu0 0.0
    %928 = vmatpush2.msra.mxu0 0.0
    %929 = vmatprep.subr.mxu0 0.0
    %930 = vmatpush2.msra.mxu0 0.0
    %931 = vmatprep.subr.mxu0 0.0
    %932 = vmatpush2.msra.mxu0 0.0
    %933 = vmatprep.subr.mxu0 0.0
    %934 = vmatpush2.msra.mxu0 0.0
    %935 = vmatprep.subr.mxu0 0.0
    %936 = vmatpush2.msra.mxu0 0.0
    %937 = vmatprep.subr.mxu0 0.0
    %938 = vmatpush2.msra.mxu0 0.0
    %939 = vmatprep.subr.mxu0 0.0
    %940 = vmatpush2.msra.mxu0 0.0
    %941 = vmatprep.subr.mxu0 0.0
    %942 = vmatpush2.msra.mxu0 0.0
    %943 = vmatprep.subr.mxu0 0.0
    %944 = vmatpush2.msra.mxu0 0.0
    %945 = vmatprep.subr.mxu0 0.0
    %946 = vmatpush2.msra.mxu0 0.0
    %947 = vmatprep.subr.mxu0 0.0
    %948 = vmatpush2.msra.mxu0 0.0
    %949 = vmatprep.subr.mxu0 0.0
    %950 = vmatpush2.msra.mxu0 0.0
    %951 = vmatprep.subr.mxu0 0.0
    %952 = vmatpush2.msra.mxu0 0.0
    %953 = vmatprep.subr.mxu0 0.0
    %954 = vmatpush2.msra.mxu0 0.0
    %955 = vmatprep.mubr.f32.mxu0 0.0
    %956 = vmatmul.mubr.f32.gmra.mxu0 %v886
    %v957 = vpop.f32.mrf.mxu0
    %v958 = vadd.f32 0.0, %v957
    %v959 = vpop.f32.mrf.mxu0
    %960 = vmatprep.mubr.f32.mxu0 0.0
    %961 = vmatmul.mubr.f32.gmra.mxu0 %v889
    %v962 = vpop.f32.mrf.mxu0
    %v963 = vadd.f32 0.0, %v962
    %v964 = vpop.f32.mrf.mxu0
    %965 = vdwg.mxu0
    %v966 = vadd.f32 %v550, %v958
    %v967 = vadd.f32 %v551, %v963
    %968 = vrot.lane.b32.xlu0 %v125, 112
    %v969 = vpop.permute.xlu0 %968
    %970 = vrot.lane.b32.xlu0 %v125, 80
    %v971 = vpop.permute.xlu0 %970
    %v972 = vsel %vm136, %v969, 0
    %v974 = vsel %vm136, %v971, 0
    %976 = vmatprep.subr.mxu0 0.0
    %977 = vmatpush1.xpose.msra.mxu0 0.0
    %978 = vmatprep.subr.mxu0 0.0
    %979 = vmatpush1.xpose.msra.mxu0 0.0
    %980 = vmatprep.subr.mxu0 0.0
    %981 = vmatpush1.xpose.msra.mxu0 0.0
    %982 = vmatprep.subr.mxu0 0.0
    %983 = vmatpush1.xpose.msra.mxu0 0.0
    %984 = vmatprep.subr.mxu0 0.0
    %985 = vmatpush1.xpose.msra.mxu0 0.0
    %986 = vmatprep.subr.mxu0 0.0
    %987 = vmatpush1.xpose.msra.mxu0 0.0
    %988 = vmatprep.subr.mxu0 0.0
    %989 = vmatpush1.xpose.msra.mxu0 0.0
    %990 = vmatprep.subr.mxu0 0.0
    %991 = vmatpush1.xpose.msra.mxu0 0.0
    %992 = vmatprep.subr.mxu0 0.0
    %993 = vmatpush1.xpose.msra.mxu0 0.0
    %994 = vmatprep.subr.mxu0 0.0
    %995 = vmatpush1.xpose.msra.mxu0 0.0
    %996 = vmatprep.subr.mxu0 0.0
    %997 = vmatpush1.xpose.msra.mxu0 0.0
    %998 = vmatprep.subr.mxu0 0.0
    %999 = vmatpush1.xpose.msra.mxu0 0.0
    %1000 = vmatprep.subr.mxu0 0.0
    %1001 = vmatpush1.xpose.msra.mxu0 0.0
    %1002 = vmatprep.subr.mxu0 0.0
    %1003 = vmatpush1.xpose.msra.mxu0 0.0
    %1004 = vmatprep.subr.mxu0 0.0
    %1005 = vmatpush1.xpose.msra.mxu0 0.0
    %1006 = vmatprep.subr.mxu0 0.0
    %1007 = vmatpush1.xpose.msra.mxu0 %v974
    %1008 = vmatprep.subr.mxu0 0.0
    %1009 = vmatpush2.xpose.msra.mxu0 0.0
    %1010 = vmatprep.subr.mxu0 0.0
    %1011 = vmatpush2.xpose.msra.mxu0 0.0
    %1012 = vmatprep.subr.mxu0 0.0
    %1013 = vmatpush2.xpose.msra.mxu0 0.0
    %1014 = vmatprep.subr.mxu0 0.0
    %1015 = vmatpush2.xpose.msra.mxu0 0.0
    %1016 = vmatprep.subr.mxu0 0.0
    %1017 = vmatpush2.xpose.msra.mxu0 0.0
    %1018 = vmatprep.subr.mxu0 0.0
    %1019 = vmatpush2.xpose.msra.mxu0 0.0
    %1020 = vmatprep.subr.mxu0 0.0
    %1021 = vmatpush2.xpose.msra.mxu0 0.0
    %1022 = vmatprep.subr.mxu0 0.0
    %1023 = vmatpush2.xpose.msra.mxu0 0.0
    %1024 = vmatprep.subr.mxu0 0.0
    %1025 = vmatpush2.xpose.msra.mxu0 0.0
    %1026 = vmatprep.subr.mxu0 0.0
    %1027 = vmatpush2.xpose.msra.mxu0 0.0
    %1028 = vmatprep.subr.mxu0 0.0
    %1029 = vmatpush2.xpose.msra.mxu0 0.0
    %1030 = vmatprep.subr.mxu0 0.0
    %1031 = vmatpush2.xpose.msra.mxu0 0.0
    %1032 = vmatprep.subr.mxu0 0.0
    %1033 = vmatpush2.xpose.msra.mxu0 0.0
    %1034 = vmatprep.subr.mxu0 0.0
    %1035 = vmatpush2.xpose.msra.mxu0 0.0
    %1036 = vmatprep.subr.mxu0 0.0
    %1037 = vmatpush2.xpose.msra.mxu0 0.0
    %1038 = vmatprep.subr.mxu0 0.0
    %1039 = vmatpush2.xpose.msra.mxu0 0.0
    %1040 = vmatprep.mubr.f32.mxu0 0.0
    %1041 = vmatmul.mubr.f32.gmra.mxu0 %v972
    %v1042 = vpop.f32.mrf.mxu0
    %v1043 = vadd.f32 0.0, %v1042
    %v1044 = vpop.f32.mrf.mxu0
    %1045 = vdwg.mxu0
    %1046 = vrot.lane.b32.xlu0 %v130, 112
    %v1047 = vpop.permute.xlu0 %1046
    %1048 = vrot.lane.b32.xlu0 %v130, 80
    %v1049 = vpop.permute.xlu0 %1048
    %v1050 = vsel %vm136, %v1047, 0
    %v1052 = vsel %vm136, %v1049, 0
    %1054 = vmatprep.subr.mxu0 0.0
    %1055 = vmatpush1.xpose.msra.mxu0 0.0
    %1056 = vmatprep.subr.mxu0 0.0
    %1057 = vmatpush1.xpose.msra.mxu0 0.0
    %1058 = vmatprep.subr.mxu0 0.0
    %1059 = vmatpush1.xpose.msra.mxu0 0.0
    %1060 = vmatprep.subr.mxu0 0.0
    %1061 = vmatpush1.xpose.msra.mxu0 0.0
    %1062 = vmatprep.subr.mxu0 0.0
    %1063 = vmatpush1.xpose.msra.mxu0 0.0
    %1064 = vmatprep.subr.mxu0 0.0
    %1065 = vmatpush1.xpose.msra.mxu0 0.0
    %1066 = vmatprep.subr.mxu0 0.0
    %1067 = vmatpush1.xpose.msra.mxu0 0.0
    %1068 = vmatprep.subr.mxu0 0.0
    %1069 = vmatpush1.xpose.msra.mxu0 0.0
    %1070 = vmatprep.subr.mxu0 0.0
    %1071 = vmatpush1.xpose.msra.mxu0 0.0
    %1072 = vmatprep.subr.mxu0 0.0
    %1073 = vmatpush1.xpose.msra.mxu0 0.0
    %1074 = vmatprep.subr.mxu0 0.0
    %1075 = vmatpush1.xpose.msra.mxu0 0.0
    %1076 = vmatprep.subr.mxu0 0.0
    %1077 = vmatpush1.xpose.msra.mxu0 0.0
    %1078 = vmatprep.subr.mxu0 0.0
    %1079 = vmatpush1.xpose.msra.mxu0 0.0
    %1080 = vmatprep.subr.mxu0 0.0
    %1081 = vmatpush1.xpose.msra.mxu0 0.0
    %1082 = vmatprep.subr.mxu0 0.0
    %1083 = vmatpush1.xpose.msra.mxu0 0.0
    %1084 = vmatprep.subr.mxu0 0.0
    %1085 = vmatpush1.xpose.msra.mxu0 %v1052
    %1086 = vmatprep.subr.mxu0 0.0
    %1087 = vmatpush2.xpose.msra.mxu0 0.0
    %1088 = vmatprep.subr.mxu0 0.0
    %1089 = vmatpush2.xpose.msra.mxu0 0.0
    %1090 = vmatprep.subr.mxu0 0.0
    %1091 = vmatpush2.xpose.msra.mxu0 0.0
    %1092 = vmatprep.subr.mxu0 0.0
    %1093 = vmatpush2.xpose.msra.mxu0 0.0
    %1094 = vmatprep.subr.mxu0 0.0
    %1095 = vmatpush2.xpose.msra.mxu0 0.0
    %1096 = vmatprep.subr.mxu0 0.0
    %1097 = vmatpush2.xpose.msra.mxu0 0.0
    %1098 = vmatprep.subr.mxu0 0.0
    %1099 = vmatpush2.xpose.msra.mxu0 0.0
    %1100 = vmatprep.subr.mxu0 0.0
    %1101 = vmatpush2.xpose.msra.mxu0 0.0
    %1102 = vmatprep.subr.mxu0 0.0
    %1103 = vmatpush2.xpose.msra.mxu0 0.0
    %1104 = vmatprep.subr.mxu0 0.0
    %1105 = vmatpush2.xpose.msra.mxu0 0.0
    %1106 = vmatprep.subr.mxu0 0.0
    %1107 = vmatpush2.xpose.msra.mxu0 0.0
    %1108 = vmatprep.subr.mxu0 0.0
    %1109 = vmatpush2.xpose.msra.mxu0 0.0
    %1110 = vmatprep.subr.mxu0 0.0
    %1111 = vmatpush2.xpose.msra.mxu0 0.0
    %1112 = vmatprep.subr.mxu0 0.0
    %1113 = vmatpush2.xpose.msra.mxu0 0.0
    %1114 = vmatprep.subr.mxu0 0.0
    %1115 = vmatpush2.xpose.msra.mxu0 0.0
    %1116 = vmatprep.subr.mxu0 0.0
    %1117 = vmatpush2.xpose.msra.mxu0 0.0
    %1118 = vmatprep.mubr.f32.mxu0 0.0
    %1119 = vmatmul.mubr.f32.gmra.mxu0 %v1050
    %v1120 = vpop.f32.mrf.mxu0
    %v1121 = vadd.f32 0.0, %v1120
    %v1122 = vpop.f32.mrf.mxu0
    %1123 = vdwg.mxu0
    %v1124 = vmul.f32 %v1043, 1.442695
    %v1125 = vpow.pop %v1124
    %v1126 = vmul.f32 %v1121, 1.442695
    %v1127 = vpow.pop %v1126
    %v1128 = vsel %vm136, %v1125, 0.0
    %1129 = vadd.xlane.f32.xlu0 %v1128
    %v1130 = vpop.xlane.xlu0 %1129
    %v1131 = vsel %vm136, %v1127, 0.0
    %1132 = vadd.xlane.f32.xlu0 %v1131
    %v1133 = vpop.xlane.xlu0 %1132
    %v1134 = vrcp.pop %v1130
    %v1135 = vrcp.pop %v1133
    %v1136 = vmul.f32 %v1130, %v1134
    %v1137 = vmul.f32 %v1133, %v1135
    %v1138 = vsub.f32 2.0, %v1136
    %v1139 = vsub.f32 2.0, %v1137
    %v1140 = vmul.f32 %v1134, %v1138
    %v1141 = vmul.f32 %v1135, %v1139
    %v1142 = vmul.f32 %v1125, %v1140
    %v1143 = vmul.f32 %v1127, %v1141
    %1144 = vrot.lane.b32.xlu0 %v125, 48
    %v1145 = vpop.permute.xlu0 %1144
    %v1148 = vsel %vm136, %v1142, 0
    %1150 = vmatprep.subr.mxu0 0.0
    %1151 = vmatpush1.msra.mxu0 0.0
    %1152 = vmatprep.subr.mxu0 0.0
    %1153 = vmatpush1.msra.mxu0 0.0
    %1154 = vmatprep.subr.mxu0 0.0
    %1155 = vmatpush1.msra.mxu0 0.0
    %1156 = vmatprep.subr.mxu0 0.0
    %1157 = vmatpush1.msra.mxu0 0.0
    %1158 = vmatprep.subr.mxu0 0.0
    %1159 = vmatpush1.msra.mxu0 0.0
    %1160 = vmatprep.subr.mxu0 0.0
    %1161 = vmatpush1.msra.mxu0 0.0
    %1162 = vmatprep.subr.mxu0 0.0
    %1163 = vmatpush1.msra.mxu0 0.0
    %1164 = vmatprep.subr.mxu0 0.0
    %1165 = vmatpush1.msra.mxu0 0.0
    %1166 = vmatprep.subr.mxu0 0.0
    %1167 = vmatpush1.msra.mxu0 0.0
    %1168 = vmatprep.subr.mxu0 0.0
    %1169 = vmatpush1.msra.mxu0 0.0
    %1170 = vmatprep.subr.mxu0 0.0
    %1171 = vmatpush1.msra.mxu0 0.0
    %1172 = vmatprep.subr.mxu0 0.0
    %1173 = vmatpush1.msra.mxu0 0.0
    %1174 = vmatprep.subr.mxu0 0.0
    %1175 = vmatpush1.msra.mxu0 0.0
    %1176 = vmatprep.subr.mxu0 0.0
    %1177 = vmatpush1.msra.mxu0 0.0
    %1178 = vmatprep.subr.mxu0 0.0
    %1179 = vmatpush1.msra.mxu0 0.0
    %1180 = vmatprep.subr.mxu0 0.0
    %1181 = vmatpush1.msra.mxu0 %v1145
    %1182 = vmatprep.subr.mxu0 0.0
    %1183 = vmatpush2.msra.mxu0 0.0
    %1184 = vmatprep.subr.mxu0 0.0
    %1185 = vmatpush2.msra.mxu0 0.0
    %1186 = vmatprep.subr.mxu0 0.0
    %1187 = vmatpush2.msra.mxu0 0.0
    %1188 = vmatprep.subr.mxu0 0.0
    %1189 = vmatpush2.msra.mxu0 0.0
    %1190 = vmatprep.subr.mxu0 0.0
    %1191 = vmatpush2.msra.mxu0 0.0
    %1192 = vmatprep.subr.mxu0 0.0
    %1193 = vmatpush2.msra.mxu0 0.0
    %1194 = vmatprep.subr.mxu0 0.0
    %1195 = vmatpush2.msra.mxu0 0.0
    %1196 = vmatprep.subr.mxu0 0.0
    %1197 = vmatpush2.msra.mxu0 0.0
    %1198 = vmatprep.subr.mxu0 0.0
    %1199 = vmatpush2.msra.mxu0 0.0
    %1200 = vmatprep.subr.mxu0 0.0
    %1201 = vmatpush2.msra.mxu0 0.0
    %1202 = vmatprep.subr.mxu0 0.0
    %1203 = vmatpush2.msra.mxu0 0.0
    %1204 = vmatprep.subr.mxu0 0.0
    %1205 = vmatpush2.msra.mxu0 0.0
    %1206 = vmatprep.subr.mxu0 0.0
    %1207 = vmatpush2.msra.mxu0 0.0
    %1208 = vmatprep.subr.mxu0 0.0
    %1209 = vmatpush2.msra.mxu0 0.0
    %1210 = vmatprep.subr.mxu0 0.0
    %1211 = vmatpush2.msra.mxu0 0.0
    %1212 = vmatprep.subr.mxu0 0.0
    %1213 = vmatpush2.msra.mxu0 0.0
    %1214 = vmatprep.mubr.f32.mxu0 0.0
    %1215 = vmatmul.mubr.f32.gmra.mxu0 %v1148
    %v1216 = vpop.f32.mrf.mxu0
    %v1217 = vadd.f32 0.0, %v1216
    %v1218 = vpop.f32.mrf.mxu0
    %1219 = vdwg.mxu0
    %1220 = vrot.lane.b32.xlu0 %v130, 48
    %v1221 = vpop.permute.xlu0 %1220
    %v1224 = vsel %vm136, %v1143, 0
    %1226 = vmatprep.subr.mxu0 0.0
    %1227 = vmatpush1.msra.mxu0 0.0
    %1228 = vmatprep.subr.mxu0 0.0
    %1229 = vmatpush1.msra.mxu0 0.0
    %1230 = vmatprep.subr.mxu0 0.0
    %1231 = vmatpush1.msra.mxu0 0.0
    %1232 = vmatprep.subr.mxu0 0.0
    %1233 = vmatpush1.msra.mxu0 0.0
    %1234 = vmatprep.subr.mxu0 0.0
    %1235 = vmatpush1.msra.mxu0 0.0
    %1236 = vmatprep.subr.mxu0 0.0
    %1237 = vmatpush1.msra.mxu0 0.0
    %1238 = vmatprep.subr.mxu0 0.0
    %1239 = vmatpush1.msra.mxu0 0.0
    %1240 = vmatprep.subr.mxu0 0.0
    %1241 = vmatpush1.msra.mxu0 0.0
    %1242 = vmatprep.subr.mxu0 0.0
    %1243 = vmatpush1.msra.mxu0 0.0
    %1244 = vmatprep.subr.mxu0 0.0
    %1245 = vmatpush1.msra.mxu0 0.0
    %1246 = vmatprep.subr.mxu0 0.0
    %1247 = vmatpush1.msra.mxu0 0.0
    %1248 = vmatprep.subr.mxu0 0.0
    %1249 = vmatpush1.msra.mxu0 0.0
    %1250 = vmatprep.subr.mxu0 0.0
    %1251 = vmatpush1.msra.mxu0 0.0
    %1252 = vmatprep.subr.mxu0 0.0
    %1253 = vmatpush1.msra.mxu0 0.0
    %1254 = vmatprep.subr.mxu0 0.0
    %1255 = vmatpush1.msra.mxu0 0.0
    %1256 = vmatprep.subr.mxu0 0.0
    %1257 = vmatpush1.msra.mxu0 %v1221
    %1258 = vmatprep.subr.mxu0 0.0
    %1259 = vmatpush2.msra.mxu0 0.0
    %1260 = vmatprep.subr.mxu0 0.0
    %1261 = vmatpush2.msra.mxu0 0.0
    %1262 = vmatprep.subr.mxu0 0.0
    %1263 = vmatpush2.msra.mxu0 0.0
    %1264 = vmatprep.subr.mxu0 0.0
    %1265 = vmatpush2.msra.mxu0 0.0
    %1266 = vmatprep.subr.mxu0 0.0
    %1267 = vmatpush2.msra.mxu0 0.0
    %1268 = vmatprep.subr.mxu0 0.0
    %1269 = vmatpush2.msra.mxu0 0.0
    %1270 = vmatprep.subr.mxu0 0.0
    %1271 = vmatpush2.msra.mxu0 0.0
    %1272 = vmatprep.subr.mxu0 0.0
    %1273 = vmatpush2.msra.mxu0 0.0
    %1274 = vmatprep.subr.mxu0 0.0
    %1275 = vmatpush2.msra.mxu0 0.0
    %1276 = vmatprep.subr.mxu0 0.0
    %1277 = vmatpush2.msra.mxu0 0.0
    %1278 = vmatprep.subr.mxu0 0.0
    %1279 = vmatpush2.msra.mxu0 0.0
    %1280 = vmatprep.subr.mxu0 0.0
    %1281 = vmatpush2.msra.mxu0 0.0
    %1282 = vmatprep.subr.mxu0 0.0
    %1283 = vmatpush2.msra.mxu0 0.0
    %1284 = vmatprep.subr.mxu0 0.0
    %1285 = vmatpush2.msra.mxu0 0.0
    %1286 = vmatprep.subr.mxu0 0.0
    %1287 = vmatpush2.msra.mxu0 0.0
    %1288 = vmatprep.subr.mxu0 0.0
    %1289 = vmatpush2.msra.mxu0 0.0
    %1290 = vmatprep.mubr.f32.mxu0 0.0
    %1291 = vmatmul.mubr.f32.gmra.mxu0 %v1224
    %v1292 = vpop.f32.mrf.mxu0
    %v1293 = vadd.f32 0.0, %v1292
    %v1294 = vpop.f32.mrf.mxu0
    %1295 = vdwg.mxu0
    %v1296 = vld [vmem:[#allocation5 + $0x20] sm:$0xff]
    %1298 = vrot.lane.b32.xlu0 %v1296, 32
    %v1299 = vpop.permute.xlu0 %1298
    %v1302 = vsel %vm136, %v1217, 0
    %v1305 = vsel %vm136, %v1293, 0
    %1307 = vmatprep.subr.mxu0 0.0
    %1308 = vmatpush1.msra.mxu0 0.0
    %1309 = vmatprep.subr.mxu0 0.0
    %1310 = vmatpush1.msra.mxu0 0.0
    %1311 = vmatprep.subr.mxu0 0.0
    %1312 = vmatpush1.msra.mxu0 0.0
    %1313 = vmatprep.subr.mxu0 0.0
    %1314 = vmatpush1.msra.mxu0 0.0
    %1315 = vmatprep.subr.mxu0 0.0
    %1316 = vmatpush1.msra.mxu0 0.0
    %1317 = vmatprep.subr.mxu0 0.0
    %1318 = vmatpush1.msra.mxu0 0.0
    %1319 = vmatprep.subr.mxu0 0.0
    %1320 = vmatpush1.msra.mxu0 0.0
    %1321 = vmatprep.subr.mxu0 0.0
    %1322 = vmatpush1.msra.mxu0 0.0
    %1323 = vmatprep.subr.mxu0 0.0
    %1324 = vmatpush1.msra.mxu0 0.0
    %1325 = vmatprep.subr.mxu0 0.0
    %1326 = vmatpush1.msra.mxu0 0.0
    %1327 = vmatprep.subr.mxu0 0.0
    %1328 = vmatpush1.msra.mxu0 0.0
    %1329 = vmatprep.subr.mxu0 0.0
    %1330 = vmatpush1.msra.mxu0 0.0
    %1331 = vmatprep.subr.mxu0 0.0
    %1332 = vmatpush1.msra.mxu0 0.0
    %1333 = vmatprep.subr.mxu0 0.0
    %1334 = vmatpush1.msra.mxu0 0.0
    %1335 = vmatprep.subr.mxu0 0.0
    %1336 = vmatpush1.msra.mxu0 0.0
    %1337 = vmatprep.subr.mxu0 0.0
    %1338 = vmatpush1.msra.mxu0 %v1299
    %1339 = vmatprep.subr.mxu0 0.0
    %1340 = vmatpush2.msra.mxu0 0.0
    %1341 = vmatprep.subr.mxu0 0.0
    %1342 = vmatpush2.msra.mxu0 0.0
    %1343 = vmatprep.subr.mxu0 0.0
    %1344 = vmatpush2.msra.mxu0 0.0
    %1345 = vmatprep.subr.mxu0 0.0
    %1346 = vmatpush2.msra.mxu0 0.0
    %1347 = vmatprep.subr.mxu0 0.0
    %1348 = vmatpush2.msra.mxu0 0.0
    %1349 = vmatprep.subr.mxu0 0.0
    %1350 = vmatpush2.msra.mxu0 0.0
    %1351 = vmatprep.subr.mxu0 0.0
    %1352 = vmatpush2.msra.mxu0 0.0
    %1353 = vmatprep.subr.mxu0 0.0
    %1354 = vmatpush2.msra.mxu0 0.0
    %1355 = vmatprep.subr.mxu0 0.0
    %1356 = vmatpush2.msra.mxu0 0.0
    %1357 = vmatprep.subr.mxu0 0.0
    %1358 = vmatpush2.msra.mxu0 0.0
    %1359 = vmatprep.subr.mxu0 0.0
    %1360 = vmatpush2.msra.mxu0 0.0
    %1361 = vmatprep.subr.mxu0 0.0
    %1362 = vmatpush2.msra.mxu0 0.0
    %1363 = vmatprep.subr.mxu0 0.0
    %1364 = vmatpush2.msra.mxu0 0.0
    %1365 = vmatprep.subr.mxu0 0.0
    %1366 = vmatpush2.msra.mxu0 0.0
    %1367 = vmatprep.subr.mxu0 0.0
    %1368 = vmatpush2.msra.mxu0 0.0
    %1369 = vmatprep.subr.mxu0 0.0
    %1370 = vmatpush2.msra.mxu0 0.0
    %1371 = vmatprep.mubr.f32.mxu0 0.0
    %1372 = vmatmul.mubr.f32.gmra.mxu0 %v1302
    %v1373 = vpop.f32.mrf.mxu0
    %v1374 = vadd.f32 0.0, %v1373
    %v1375 = vpop.f32.mrf.mxu0
    %1376 = vmatprep.mubr.f32.mxu0 0.0
    %1377 = vmatmul.mubr.f32.gmra.mxu0 %v1305
    %v1378 = vpop.f32.mrf.mxu0
    %v1379 = vadd.f32 0.0, %v1378
    %v1380 = vpop.f32.mrf.mxu0
    %1381 = vdwg.mxu0
    %v1382 = vadd.f32 %v966, %v1374
    %v1383 = vadd.f32 %v967, %v1379
    %1384 = vrot.lane.b32.xlu0 %v125, 104
    %v1385 = vpop.permute.xlu0 %1384
    %1386 = vrot.lane.b32.xlu0 %v125, 72
    %v1387 = vpop.permute.xlu0 %1386
    %v1388 = vsel %vm136, %v1385, 0
    %v1390 = vsel %vm136, %v1387, 0
    %1392 = vmatprep.subr.mxu0 0.0
    %1393 = vmatpush1.xpose.msra.mxu0 0.0
    %1394 = vmatprep.subr.mxu0 0.0
    %1395 = vmatpush1.xpose.msra.mxu0 0.0
    %1396 = vmatprep.subr.mxu0 0.0
    %1397 = vmatpush1.xpose.msra.mxu0 0.0
    %1398 = vmatprep.subr.mxu0 0.0
    %1399 = vmatpush1.xpose.msra.mxu0 0.0
    %1400 = vmatprep.subr.mxu0 0.0
    %1401 = vmatpush1.xpose.msra.mxu0 0.0
    %1402 = vmatprep.subr.mxu0 0.0
    %1403 = vmatpush1.xpose.msra.mxu0 0.0
    %1404 = vmatprep.subr.mxu0 0.0
    %1405 = vmatpush1.xpose.msra.mxu0 0.0
    %1406 = vmatprep.subr.mxu0 0.0
    %1407 = vmatpush1.xpose.msra.mxu0 0.0
    %1408 = vmatprep.subr.mxu0 0.0
    %1409 = vmatpush1.xpose.msra.mxu0 0.0
    %1410 = vmatprep.subr.mxu0 0.0
    %1411 = vmatpush1.xpose.msra.mxu0 0.0
    %1412 = vmatprep.subr.mxu0 0.0
    %1413 = vmatpush1.xpose.msra.mxu0 0.0
    %1414 = vmatprep.subr.mxu0 0.0
    %1415 = vmatpush1.xpose.msra.mxu0 0.0
    %1416 = vmatprep.subr.mxu0 0.0
    %1417 = vmatpush1.xpose.msra.mxu0 0.0
    %1418 = vmatprep.subr.mxu0 0.0
    %1419 = vmatpush1.xpose.msra.mxu0 0.0
    %1420 = vmatprep.subr.mxu0 0.0
    %1421 = vmatpush1.xpose.msra.mxu0 0.0
    %1422 = vmatprep.subr.mxu0 0.0
    %1423 = vmatpush1.xpose.msra.mxu0 %v1390
    %1424 = vmatprep.subr.mxu0 0.0
    %1425 = vmatpush2.xpose.msra.mxu0 0.0
    %1426 = vmatprep.subr.mxu0 0.0
    %1427 = vmatpush2.xpose.msra.mxu0 0.0
    %1428 = vmatprep.subr.mxu0 0.0
    %1429 = vmatpush2.xpose.msra.mxu0 0.0
    %1430 = vmatprep.subr.mxu0 0.0
    %1431 = vmatpush2.xpose.msra.mxu0 0.0
    %1432 = vmatprep.subr.mxu0 0.0
    %1433 = vmatpush2.xpose.msra.mxu0 0.0
    %1434 = vmatprep.subr.mxu0 0.0
    %1435 = vmatpush2.xpose.msra.mxu0 0.0
    %1436 = vmatprep.subr.mxu0 0.0
    %1437 = vmatpush2.xpose.msra.mxu0 0.0
    %1438 = vmatprep.subr.mxu0 0.0
    %1439 = vmatpush2.xpose.msra.mxu0 0.0
    %1440 = vmatprep.subr.mxu0 0.0
    %1441 = vmatpush2.xpose.msra.mxu0 0.0
    %1442 = vmatprep.subr.mxu0 0.0
    %1443 = vmatpush2.xpose.msra.mxu0 0.0
    %1444 = vmatprep.subr.mxu0 0.0
    %1445 = vmatpush2.xpose.msra.mxu0 0.0
    %1446 = vmatprep.subr.mxu0 0.0
    %1447 = vmatpush2.xpose.msra.mxu0 0.0
    %1448 = vmatprep.subr.mxu0 0.0
    %1449 = vmatpush2.xpose.msra.mxu0 0.0
    %1450 = vmatprep.subr.mxu0 0.0
    %1451 = vmatpush2.xpose.msra.mxu0 0.0
    %1452 = vmatprep.subr.mxu0 0.0
    %1453 = vmatpush2.xpose.msra.mxu0 0.0
    %1454 = vmatprep.subr.mxu0 0.0
    %1455 = vmatpush2.xpose.msra.mxu0 0.0
    %1456 = vmatprep.mubr.f32.mxu0 0.0
    %1457 = vmatmul.mubr.f32.gmra.mxu0 %v1388
    %v1458 = vpop.f32.mrf.mxu0
    %v1459 = vadd.f32 0.0, %v1458
    %v1460 = vpop.f32.mrf.mxu0
    %1461 = vdwg.mxu0
    %1462 = vrot.lane.b32.xlu0 %v130, 104
    %v1463 = vpop.permute.xlu0 %1462
    %1464 = vrot.lane.b32.xlu0 %v130, 72
    %v1465 = vpop.permute.xlu0 %1464
    %v1466 = vsel %vm136, %v1463, 0
    %v1468 = vsel %vm136, %v1465, 0
    %1470 = vmatprep.subr.mxu0 0.0
    %1471 = vmatpush1.xpose.msra.mxu0 0.0
    %1472 = vmatprep.subr.mxu0 0.0
    %1473 = vmatpush1.xpose.msra.mxu0 0.0
    %1474 = vmatprep.subr.mxu0 0.0
    %1475 = vmatpush1.xpose.msra.mxu0 0.0
    %1476 = vmatprep.subr.mxu0 0.0
    %1477 = vmatpush1.xpose.msra.mxu0 0.0
    %1478 = vmatprep.subr.mxu0 0.0
    %1479 = vmatpush1.xpose.msra.mxu0 0.0
    %1480 = vmatprep.subr.mxu0 0.0
    %1481 = vmatpush1.xpose.msra.mxu0 0.0
    %1482 = vmatprep.subr.mxu0 0.0
    %1483 = vmatpush1.xpose.msra.mxu0 0.0
    %1484 = vmatprep.subr.mxu0 0.0
    %1485 = vmatpush1.xpose.msra.mxu0 0.0
    %1486 = vmatprep.subr.mxu0 0.0
    %1487 = vmatpush1.xpose.msra.mxu0 0.0
    %1488 = vmatprep.subr.mxu0 0.0
    %1489 = vmatpush1.xpose.msra.mxu0 0.0
    %1490 = vmatprep.subr.mxu0 0.0
    %1491 = vmatpush1.xpose.msra.mxu0 0.0
    %1492 = vmatprep.subr.mxu0 0.0
    %1493 = vmatpush1.xpose.msra.mxu0 0.0
    %1494 = vmatprep.subr.mxu0 0.0
    %1495 = vmatpush1.xpose.msra.mxu0 0.0
    %1496 = vmatprep.subr.mxu0 0.0
    %1497 = vmatpush1.xpose.msra.mxu0 0.0
    %1498 = vmatprep.subr.mxu0 0.0
    %1499 = vmatpush1.xpose.msra.mxu0 0.0
    %1500 = vmatprep.subr.mxu0 0.0
    %1501 = vmatpush1.xpose.msra.mxu0 %v1468
    %1502 = vmatprep.subr.mxu0 0.0
    %1503 = vmatpush2.xpose.msra.mxu0 0.0
    %1504 = vmatprep.subr.mxu0 0.0
    %1505 = vmatpush2.xpose.msra.mxu0 0.0
    %1506 = vmatprep.subr.mxu0 0.0
    %1507 = vmatpush2.xpose.msra.mxu0 0.0
    %1508 = vmatprep.subr.mxu0 0.0
    %1509 = vmatpush2.xpose.msra.mxu0 0.0
    %1510 = vmatprep.subr.mxu0 0.0
    %1511 = vmatpush2.xpose.msra.mxu0 0.0
    %1512 = vmatprep.subr.mxu0 0.0
    %1513 = vmatpush2.xpose.msra.mxu0 0.0
    %1514 = vmatprep.subr.mxu0 0.0
    %1515 = vmatpush2.xpose.msra.mxu0 0.0
    %1516 = vmatprep.subr.mxu0 0.0
    %1517 = vmatpush2.xpose.msra.mxu0 0.0
    %1518 = vmatprep.subr.mxu0 0.0
    %1519 = vmatpush2.xpose.msra.mxu0 0.0
    %1520 = vmatprep.subr.mxu0 0.0
    %1521 = vmatpush2.xpose.msra.mxu0 0.0
    %1522 = vmatprep.subr.mxu0 0.0
    %1523 = vmatpush2.xpose.msra.mxu0 0.0
    %1524 = vmatprep.subr.mxu0 0.0
    %1525 = vmatpush2.xpose.msra.mxu0 0.0
    %1526 = vmatprep.subr.mxu0 0.0
    %1527 = vmatpush2.xpose.msra.mxu0 0.0
    %1528 = vmatprep.subr.mxu0 0.0
    %1529 = vmatpush2.xpose.msra.mxu0 0.0
    %1530 = vmatprep.subr.mxu0 0.0
    %1531 = vmatpush2.xpose.msra.mxu0 0.0
    %1532 = vmatprep.subr.mxu0 0.0
    %1533 = vmatpush2.xpose.msra.mxu0 0.0
    %1534 = vmatprep.mubr.f32.mxu0 0.0
    %1535 = vmatmul.mubr.f32.gmra.mxu0 %v1466
    %v1536 = vpop.f32.mrf.mxu0
    %v1537 = vadd.f32 0.0, %v1536
    %v1538 = vpop.f32.mrf.mxu0
    %1539 = vdwg.mxu0
    %v1540 = vmul.f32 %v1459, 1.442695
    %v1541 = vpow.pop %v1540
    %v1542 = vmul.f32 %v1537, 1.442695
    %v1543 = vpow.pop %v1542
    %v1544 = vsel %vm136, %v1541, 0.0
    %1545 = vadd.xlane.f32.xlu0 %v1544
    %v1546 = vpop.xlane.xlu0 %1545
    %v1547 = vsel %vm136, %v1543, 0.0
    %1548 = vadd.xlane.f32.xlu0 %v1547
    %v1549 = vpop.xlane.xlu0 %1548
    %v1550 = vrcp.pop %v1546
    %v1551 = vrcp.pop %v1549
    %v1552 = vmul.f32 %v1546, %v1550
    %v1553 = vmul.f32 %v1549, %v1551
    %v1554 = vsub.f32 2.0, %v1552
    %v1555 = vsub.f32 2.0, %v1553
    %v1556 = vmul.f32 %v1550, %v1554
    %v1557 = vmul.f32 %v1551, %v1555
    %v1558 = vmul.f32 %v1541, %v1556
    %v1559 = vmul.f32 %v1543, %v1557
    %1560 = vrot.lane.b32.xlu0 %v125, 40
    %v1561 = vpop.permute.xlu0 %1560
    %v1564 = vsel %vm136, %v1558, 0
    %1566 = vmatprep.subr.mxu0 0.0
    %1567 = vmatpush1.msra.mxu0 0.0
    %1568 = vmatprep.subr.mxu0 0.0
    %1569 = vmatpush1.msra.mxu0 0.0
    %1570 = vmatprep.subr.mxu0 0.0
    %1571 = vmatpush1.msra.mxu0 0.0
    %1572 = vmatprep.subr.mxu0 0.0
    %1573 = vmatpush1.msra.mxu0 0.0
    %1574 = vmatprep.subr.mxu0 0.0
    %1575 = vmatpush1.msra.mxu0 0.0
    %1576 = vmatprep.subr.mxu0 0.0
    %1577 = vmatpush1.msra.mxu0 0.0
    %1578 = vmatprep.subr.mxu0 0.0
    %1579 = vmatpush1.msra.mxu0 0.0
    %1580 = vmatprep.subr.mxu0 0.0
    %1581 = vmatpush1.msra.mxu0 0.0
    %1582 = vmatprep.subr.mxu0 0.0
    %1583 = vmatpush1.msra.mxu0 0.0
    %1584 = vmatprep.subr.mxu0 0.0
    %1585 = vmatpush1.msra.mxu0 0.0
    %1586 = vmatprep.subr.mxu0 0.0
    %1587 = vmatpush1.msra.mxu0 0.0
    %1588 = vmatprep.subr.mxu0 0.0
    %1589 = vmatpush1.msra.mxu0 0.0
    %1590 = vmatprep.subr.mxu0 0.0
    %1591 = vmatpush1.msra.mxu0 0.0
    %1592 = vmatprep.subr.mxu0 0.0
    %1593 = vmatpush1.msra.mxu0 0.0
    %1594 = vmatprep.subr.mxu0 0.0
    %1595 = vmatpush1.msra.mxu0 0.0
    %1596 = vmatprep.subr.mxu0 0.0
    %1597 = vmatpush1.msra.mxu0 %v1561
    %1598 = vmatprep.subr.mxu0 0.0
    %1599 = vmatpush2.msra.mxu0 0.0
    %1600 = vmatprep.subr.mxu0 0.0
    %1601 = vmatpush2.msra.mxu0 0.0
    %1602 = vmatprep.subr.mxu0 0.0
    %1603 = vmatpush2.msra.mxu0 0.0
    %1604 = vmatprep.subr.mxu0 0.0
    %1605 = vmatpush2.msra.mxu0 0.0
    %1606 = vmatprep.subr.mxu0 0.0
    %1607 = vmatpush2.msra.mxu0 0.0
    %1608 = vmatprep.subr.mxu0 0.0
    %1609 = vmatpush2.msra.mxu0 0.0
    %1610 = vmatprep.subr.mxu0 0.0
    %1611 = vmatpush2.msra.mxu0 0.0
    %1612 = vmatprep.subr.mxu0 0.0
    %1613 = vmatpush2.msra.mxu0 0.0
    %1614 = vmatprep.subr.mxu0 0.0
    %1615 = vmatpush2.msra.mxu0 0.0
    %1616 = vmatprep.subr.mxu0 0.0
    %1617 = vmatpush2.msra.mxu0 0.0
    %1618 = vmatprep.subr.mxu0 0.0
    %1619 = vmatpush2.msra.mxu0 0.0
    %1620 = vmatprep.subr.mxu0 0.0
    %1621 = vmatpush2.msra.mxu0 0.0
    %1622 = vmatprep.subr.mxu0 0.0
    %1623 = vmatpush2.msra.mxu0 0.0
    %1624 = vmatprep.subr.mxu0 0.0
    %1625 = vmatpush2.msra.mxu0 0.0
    %1626 = vmatprep.subr.mxu0 0.0
    %1627 = vmatpush2.msra.mxu0 0.0
    %1628 = vmatprep.subr.mxu0 0.0
    %1629 = vmatpush2.msra.mxu0 0.0
    %1630 = vmatprep.mubr.f32.mxu0 0.0
    %1631 = vmatmul.mubr.f32.gmra.mxu0 %v1564
    %v1632 = vpop.f32.mrf.mxu0
    %v1633 = vadd.f32 0.0, %v1632
    %v1634 = vpop.f32.mrf.mxu0
    %1635 = vdwg.mxu0
    %1636 = vrot.lane.b32.xlu0 %v130, 40
    %v1637 = vpop.permute.xlu0 %1636
    %v1640 = vsel %vm136, %v1559, 0
    %1642 = vmatprep.subr.mxu0 0.0
    %1643 = vmatpush1.msra.mxu0 0.0
    %1644 = vmatprep.subr.mxu0 0.0
    %1645 = vmatpush1.msra.mxu0 0.0
    %1646 = vmatprep.subr.mxu0 0.0
    %1647 = vmatpush1.msra.mxu0 0.0
    %1648 = vmatprep.subr.mxu0 0.0
    %1649 = vmatpush1.msra.mxu0 0.0
    %1650 = vmatprep.subr.mxu0 0.0
    %1651 = vmatpush1.msra.mxu0 0.0
    %1652 = vmatprep.subr.mxu0 0.0
    %1653 = vmatpush1.msra.mxu0 0.0
    %1654 = vmatprep.subr.mxu0 0.0
    %1655 = vmatpush1.msra.mxu0 0.0
    %1656 = vmatprep.subr.mxu0 0.0
    %1657 = vmatpush1.msra.mxu0 0.0
    %1658 = vmatprep.subr.mxu0 0.0
    %1659 = vmatpush1.msra.mxu0 0.0
    %1660 = vmatprep.subr.mxu0 0.0
    %1661 = vmatpush1.msra.mxu0 0.0
    %1662 = vmatprep.subr.mxu0 0.0
    %1663 = vmatpush1.msra.mxu0 0.0
    %1664 = vmatprep.subr.mxu0 0.0
    %1665 = vmatpush1.msra.mxu0 0.0
    %1666 = vmatprep.subr.mxu0 0.0
    %1667 = vmatpush1.msra.mxu0 0.0
    %1668 = vmatprep.subr.mxu0 0.0
    %1669 = vmatpush1.msra.mxu0 0.0
    %1670 = vmatprep.subr.mxu0 0.0
    %1671 = vmatpush1.msra.mxu0 0.0
    %1672 = vmatprep.subr.mxu0 0.0
    %1673 = vmatpush1.msra.mxu0 %v1637
    %1674 = vmatprep.subr.mxu0 0.0
    %1675 = vmatpush2.msra.mxu0 0.0
    %1676 = vmatprep.subr.mxu0 0.0
    %1677 = vmatpush2.msra.mxu0 0.0
    %1678 = vmatprep.subr.mxu0 0.0
    %1679 = vmatpush2.msra.mxu0 0.0
    %1680 = vmatprep.subr.mxu0 0.0
    %1681 = vmatpush2.msra.mxu0 0.0
    %1682 = vmatprep.subr.mxu0 0.0
    %1683 = vmatpush2.msra.mxu0 0.0
    %1684 = vmatprep.subr.mxu0 0.0
    %1685 = vmatpush2.msra.mxu0 0.0
    %1686 = vmatprep.subr.mxu0 0.0
    %1687 = vmatpush2.msra.mxu0 0.0
    %1688 = vmatprep.subr.mxu0 0.0
    %1689 = vmatpush2.msra.mxu0 0.0
    %1690 = vmatprep.subr.mxu0 0.0
    %1691 = vmatpush2.msra.mxu0 0.0
    %1692 = vmatprep.subr.mxu0 0.0
    %1693 = vmatpush2.msra.mxu0 0.0
    %1694 = vmatprep.subr.mxu0 0.0
    %1695 = vmatpush2.msra.mxu0 0.0
    %1696 = vmatprep.subr.mxu0 0.0
    %1697 = vmatpush2.msra.mxu0 0.0
    %1698 = vmatprep.subr.mxu0 0.0
    %1699 = vmatpush2.msra.mxu0 0.0
    %1700 = vmatprep.subr.mxu0 0.0
    %1701 = vmatpush2.msra.mxu0 0.0
    %1702 = vmatprep.subr.mxu0 0.0
    %1703 = vmatpush2.msra.mxu0 0.0
    %1704 = vmatprep.subr.mxu0 0.0
    %1705 = vmatpush2.msra.mxu0 0.0
    %1706 = vmatprep.mubr.f32.mxu0 0.0
    %1707 = vmatmul.mubr.f32.gmra.mxu0 %v1640
    %v1708 = vpop.f32.mrf.mxu0
    %v1709 = vadd.f32 0.0, %v1708
    %v1710 = vpop.f32.mrf.mxu0
    %1711 = vdwg.mxu0
    %v1712 = vld [vmem:[#allocation5 + $0x30] sm:$0xff]
    %1714 = vrot.lane.b32.xlu0 %v1712, 32
    %v1715 = vpop.permute.xlu0 %1714
    %v1718 = vsel %vm136, %v1633, 0
    %v1721 = vsel %vm136, %v1709, 0
    %1723 = vmatprep.subr.mxu0 0.0
    %1724 = vmatpush1.msra.mxu0 0.0
    %1725 = vmatprep.subr.mxu0 0.0
    %1726 = vmatpush1.msra.mxu0 0.0
    %1727 = vmatprep.subr.mxu0 0.0
    %1728 = vmatpush1.msra.mxu0 0.0
    %1729 = vmatprep.subr.mxu0 0.0
    %1730 = vmatpush1.msra.mxu0 0.0
    %1731 = vmatprep.subr.mxu0 0.0
    %1732 = vmatpush1.msra.mxu0 0.0
    %1733 = vmatprep.subr.mxu0 0.0
    %1734 = vmatpush1.msra.mxu0 0.0
    %1735 = vmatprep.subr.mxu0 0.0
    %1736 = vmatpush1.msra.mxu0 0.0
    %1737 = vmatprep.subr.mxu0 0.0
    %1738 = vmatpush1.msra.mxu0 0.0
    %1739 = vmatprep.subr.mxu0 0.0
    %1740 = vmatpush1.msra.mxu0 0.0
    %1741 = vmatprep.subr.mxu0 0.0
    %1742 = vmatpush1.msra.mxu0 0.0
    %1743 = vmatprep.subr.mxu0 0.0
    %1744 = vmatpush1.msra.mxu0 0.0
    %1745 = vmatprep.subr.mxu0 0.0
    %1746 = vmatpush1.msra.mxu0 0.0
    %1747 = vmatprep.subr.mxu0 0.0
    %1748 = vmatpush1.msra.mxu0 0.0
    %1749 = vmatprep.subr.mxu0 0.0
    %1750 = vmatpush1.msra.mxu0 0.0
    %1751 = vmatprep.subr.mxu0 0.0
    %1752 = vmatpush1.msra.mxu0 0.0
    %1753 = vmatprep.subr.mxu0 0.0
    %1754 = vmatpush1.msra.mxu0 %v1715
    %1755 = vmatprep.subr.mxu0 0.0
    %1756 = vmatpush2.msra.mxu0 0.0
    %1757 = vmatprep.subr.mxu0 0.0
    %1758 = vmatpush2.msra.mxu0 0.0
    %1759 = vmatprep.subr.mxu0 0.0
    %1760 = vmatpush2.msra.mxu0 0.0
    %1761 = vmatprep.subr.mxu0 0.0
    %1762 = vmatpush2.msra.mxu0 0.0
    %1763 = vmatprep.subr.mxu0 0.0
    %1764 = vmatpush2.msra.mxu0 0.0
    %1765 = vmatprep.subr.mxu0 0.0
    %1766 = vmatpush2.msra.mxu0 0.0
    %1767 = vmatprep.subr.mxu0 0.0
    %1768 = vmatpush2.msra.mxu0 0.0
    %1769 = vmatprep.subr.mxu0 0.0
    %1770 = vmatpush2.msra.mxu0 0.0
    %1771 = vmatprep.subr.mxu0 0.0
    %1772 = vmatpush2.msra.mxu0 0.0
    %1773 = vmatprep.subr.mxu0 0.0
    %1774 = vmatpush2.msra.mxu0 0.0
    %1775 = vmatprep.subr.mxu0 0.0
    %1776 = vmatpush2.msra.mxu0 0.0
    %1777 = vmatprep.subr.mxu0 0.0
    %1778 = vmatpush2.msra.mxu0 0.0
    %1779 = vmatprep.subr.mxu0 0.0
    %1780 = vmatpush2.msra.mxu0 0.0
    %1781 = vmatprep.subr.mxu0 0.0
    %1782 = vmatpush2.msra.mxu0 0.0
    %1783 = vmatprep.subr.mxu0 0.0
    %1784 = vmatpush2.msra.mxu0 0.0
    %1785 = vmatprep.subr.mxu0 0.0
    %1786 = vmatpush2.msra.mxu0 0.0
    %1787 = vmatprep.mubr.f32.mxu0 0.0
    %1788 = vmatmul.mubr.f32.gmra.mxu0 %v1718
    %v1789 = vpop.f32.mrf.mxu0
    %v1790 = vadd.f32 0.0, %v1789
    %v1791 = vpop.f32.mrf.mxu0
    %1792 = vmatprep.mubr.f32.mxu0 0.0
    %1793 = vmatmul.mubr.f32.gmra.mxu0 %v1721
    %v1794 = vpop.f32.mrf.mxu0
    %v1795 = vadd.f32 0.0, %v1794
    %v1796 = vpop.f32.mrf.mxu0
    %1797 = vdwg.mxu0
    %v1798 = vadd.f32 %v1382, %v1790
    %v1799 = vadd.f32 %v1383, %v1795
    %v1800 = vadd.f32 %v40, %v1798
    %v1801 = vadd.f32 %v41, %v1799
    %v1802 = vsel %vm51, %v1800, 0.0
    %v1803 = vrot.slane %v1802, 4
    %v1804 = vadd.f32 %v1802, %v1803
    %v1805 = vrot.slane %v1804, 2
    %v1806 = vadd.f32 %v1804, %v1805
    %v1807 = vrot.slane %v1806, 1
    %v1808 = vadd.f32 %v1806, %v1807
    %v1809 = vrcp.pop 8.0
    %v1810 = vmul.f32 %v1808, %v1809
    %v1811 = vsub.f32 %v1800, %v1810
    %v1812 = vmul.f32 %v1811, %v1811
    %v1813 = vsel %vm51, %v1812, 0.0
    %v1814 = vrot.slane %v1813, 4
    %v1815 = vadd.f32 %v1813, %v1814
    %v1816 = vrot.slane %v1815, 2
    %v1817 = vadd.f32 %v1815, %v1816
    %v1818 = vrot.slane %v1817, 1
    %v1819 = vadd.f32 %v1817, %v1818
    %v1820 = vmul.f32 %v1819, %v1809
    %v1821 = vadd.f32 %v1820, 1e-05
    %v1822 = vrsqrt.pop %v1821
    %v1823 = vmul.f32 %v1811, %v1822
    %v1824 = vsel %vm51, %v1801, 0.0
    %v1825 = vrot.slane %v1824, 4
    %v1826 = vadd.f32 %v1824, %v1825
    %v1827 = vrot.slane %v1826, 2
    %v1828 = vadd.f32 %v1826, %v1827
    %v1829 = vrot.slane %v1828, 1
    %v1830 = vadd.f32 %v1828, %v1829
    %v1831 = vmul.f32 %v1830, %v1809
    %v1832 = vsub.f32 %v1801, %v1831
    %v1833 = vmul.f32 %v1832, %v1832
    %v1834 = vsel %vm51, %v1833, 0.0
    %v1835 = vrot.slane %v1834, 4
    %v1836 = vadd.f32 %v1834, %v1835
    %v1837 = vrot.slane %v1836, 2
    %v1838 = vadd.f32 %v1836, %v1837
    %v1839 = vrot.slane %v1838, 1
    %v1840 = vadd.f32 %v1838, %v1839
    %v1841 = vmul.f32 %v1840, %v1809
    %v1842 = vadd.f32 %v1841, 1e-05
    %v1843 = vrsqrt.pop %v1842
    %v1844 = vmul.f32 %v1832, %v1843
    %v1845 = vlaneseq
    %v1846 = vshrl.u32 %v1845, 7
    %v1847 = vsub.s32 1, %v1846
    %v1848 = vrot.slane %v50, %v1847
    %v1849 = vmul.f32 %v1848, %v1823
    %v1850 = vmul.f32 %v1848, %v1844
    %v1851 = vlaneseq
    %v1852 = vshrl.u32 %v1851, 7
    %v1853 = vsub.s32 2, %v1852
    %v1854 = vrot.slane %v50, %v1853
    %v1855 = vadd.f32 %v1849, %v1854
    %v1856 = vadd.f32 %v1850, %v1854
    %v1857 = vlaneseq
    %v1858 = vshrl.u32 %v1857, 7
    %v1859 = vsub.s32 3, %v1858
    %v1860 = vrot.slane %v50, %v1859
    %v1862 = vsel %vm51, %v1855, 0
    %v1865 = vsel %vm51, %v1856, 0
    %1867 = vmatprep.subr.mxu0 0.0
    %1868 = vmatpush1.msra.mxu0 0.0
    %1869 = vmatprep.subr.mxu0 0.0
    %1870 = vmatpush1.msra.mxu0 0.0
    %1871 = vmatprep.subr.mxu0 0.0
    %1872 = vmatpush1.msra.mxu0 0.0
    %1873 = vmatprep.subr.mxu0 0.0
    %1874 = vmatpush1.msra.mxu0 0.0
    %1875 = vmatprep.subr.mxu0 0.0
    %1876 = vmatpush1.msra.mxu0 0.0
    %1877 = vmatprep.subr.mxu0 0.0
    %1878 = vmatpush1.msra.mxu0 0.0
    %1879 = vmatprep.subr.mxu0 0.0
    %1880 = vmatpush1.msra.mxu0 0.0
    %1881 = vmatprep.subr.mxu0 0.0
    %1882 = vmatpush1.msra.mxu0 0.0
    %1883 = vmatprep.subr.mxu0 0.0
    %1884 = vmatpush1.msra.mxu0 0.0
    %1885 = vmatprep.subr.mxu0 0.0
    %1886 = vmatpush1.msra.mxu0 0.0
    %1887 = vmatprep.subr.mxu0 0.0
    %1888 = vmatpush1.msra.mxu0 0.0
    %1889 = vmatprep.subr.mxu0 0.0
    %1890 = vmatpush1.msra.mxu0 0.0
    %1891 = vmatprep.subr.mxu0 0.0
    %1892 = vmatpush1.msra.mxu0 %v49
    %1893 = vmatprep.subr.mxu0 0.0
    %1894 = vmatpush1.msra.mxu0 %v48
    %1895 = vmatprep.subr.mxu0 0.0
    %1896 = vmatpush1.msra.mxu0 %v47
    %1897 = vmatprep.subr.mxu0 0.0
    %1898 = vmatpush1.msra.mxu0 %v46
    %1899 = vmatprep.subr.mxu0 0.0
    %1900 = vmatpush2.msra.mxu0 0.0
    %1901 = vmatprep.subr.mxu0 0.0
    %1902 = vmatpush2.msra.mxu0 0.0
    %1903 = vmatprep.subr.mxu0 0.0
    %1904 = vmatpush2.msra.mxu0 0.0
    %1905 = vmatprep.subr.mxu0 0.0
    %1906 = vmatpush2.msra.mxu0 0.0
    %1907 = vmatprep.subr.mxu0 0.0
    %1908 = vmatpush2.msra.mxu0 0.0
    %1909 = vmatprep.subr.mxu0 0.0
    %1910 = vmatpush2.msra.mxu0 0.0
    %1911 = vmatprep.subr.mxu0 0.0
    %1912 = vmatpush2.msra.mxu0 0.0
    %1913 = vmatprep.subr.mxu0 0.0
    %1914 = vmatpush2.msra.mxu0 0.0
    %1915 = vmatprep.subr.mxu0 0.0
    %1916 = vmatpush2.msra.mxu0 0.0
    %1917 = vmatprep.subr.mxu0 0.0
    %1918 = vmatpush2.msra.mxu0 0.0
    %1919 = vmatprep.subr.mxu0 0.0
    %1920 = vmatpush2.msra.mxu0 0.0
    %1921 = vmatprep.subr.mxu0 0.0
    %1922 = vmatpush2.msra.mxu0 0.0
    %1923 = vmatprep.subr.mxu0 0.0
    %1924 = vmatpush2.msra.mxu0 0.0
    %1925 = vmatprep.subr.mxu0 0.0
    %1926 = vmatpush2.msra.mxu0 0.0
    %1927 = vmatprep.subr.mxu0 0.0
    %1928 = vmatpush2.msra.mxu0 0.0
    %1929 = vmatprep.subr.mxu0 0.0
    %1930 = vmatpush2.msra.mxu0 0.0
    %1931 = vmatprep.mubr.f32.mxu0 0.0
    %1932 = vmatmul.mubr.f32.gmra.mxu0 %v1862
    %v1933 = vpop.f32.mrf.mxu0
    %v1934 = vadd.f32 %v1860, %v1933
    %v1935 = vpop.f32.mrf.mxu0
    %1936 = vmatprep.mubr.f32.mxu0 0.0
    %1937 = vmatmul.mubr.f32.gmra.mxu0 %v1865
    %v1938 = vpop.f32.mrf.mxu0
    %v1939 = vadd.f32 %v1860, %v1938
    %v1940 = vpop.f32.mrf.mxu0
    %1941 = vdwg.mxu0
    %v1942 = vmax.f32 %v1934, 0.0
    %v1943 = vmax.f32 %v1939, 0.0
    %v1944 = vlaneseq
    %v1945 = vshrl.u32 %v1944, 7
    %v1946 = vsub.s32 4, %v1945
    %v1947 = vrot.slane %v50, %v1946
    %1952 = vrot.lane.b32.xlu0 %v46, 64
    %v1953 = vpop.permute.xlu0 %1952
    %1954 = vrot.lane.b32.xlu0 %v47, 64
    %v1955 = vpop.permute.xlu0 %1954
    %1956 = vrot.lane.b32.xlu0 %v48, 64
    %v1957 = vpop.permute.xlu0 %1956
    %1958 = vrot.lane.b32.xlu0 %v49, 64
    %v1959 = vpop.permute.xlu0 %1958
    %vm1960 = vcmask 523264
    %v1962 = vsel %vm1960, %v1942, 0
    %v1965 = vsel %vm1960, %v1943, 0
    %v1967 = vsel %vm1960, %v1953, 0
    %v1969 = vsel %vm1960, %v1955, 0
    %v1971 = vsel %vm1960, %v1957, 0
    %v1973 = vsel %vm1960, %v1959, 0
    %1975 = vmatprep.subr.mxu0 0.0
    %1976 = vmatpush1.xpose.msra.mxu0 0.0
    %1977 = vmatprep.subr.mxu0 0.0
    %1978 = vmatpush1.xpose.msra.mxu0 0.0
    %1979 = vmatprep.subr.mxu0 0.0
    %1980 = vmatpush1.xpose.msra.mxu0 0.0
    %1981 = vmatprep.subr.mxu0 0.0
    %1982 = vmatpush1.xpose.msra.mxu0 0.0
    %1983 = vmatprep.subr.mxu0 0.0
    %1984 = vmatpush1.xpose.msra.mxu0 0.0
    %1985 = vmatprep.subr.mxu0 0.0
    %1986 = vmatpush1.xpose.msra.mxu0 0.0
    %1987 = vmatprep.subr.mxu0 0.0
    %1988 = vmatpush1.xpose.msra.mxu0 0.0
    %1989 = vmatprep.subr.mxu0 0.0
    %1990 = vmatpush1.xpose.msra.mxu0 0.0
    %1991 = vmatprep.subr.mxu0 0.0
    %1992 = vmatpush1.xpose.msra.mxu0 0.0
    %1993 = vmatprep.subr.mxu0 0.0
    %1994 = vmatpush1.xpose.msra.mxu0 0.0
    %1995 = vmatprep.subr.mxu0 0.0
    %1996 = vmatpush1.xpose.msra.mxu0 0.0
    %1997 = vmatprep.subr.mxu0 0.0
    %1998 = vmatpush1.xpose.msra.mxu0 0.0
    %1999 = vmatprep.subr.mxu0 0.0
    %2000 = vmatpush1.xpose.msra.mxu0 %v1973
    %2001 = vmatprep.subr.mxu0 0.0
    %2002 = vmatpush1.xpose.msra.mxu0 %v1971
    %2003 = vmatprep.subr.mxu0 0.0
    %2004 = vmatpush1.xpose.msra.mxu0 %v1969
    %2005 = vmatprep.subr.mxu0 0.0
    %2006 = vmatpush1.xpose.msra.mxu0 %v1967
    %2007 = vmatprep.subr.mxu0 0.0
    %2008 = vmatpush2.xpose.msra.mxu0 0.0
    %2009 = vmatprep.subr.mxu0 0.0
    %2010 = vmatpush2.xpose.msra.mxu0 0.0
    %2011 = vmatprep.subr.mxu0 0.0
    %2012 = vmatpush2.xpose.msra.mxu0 0.0
    %2013 = vmatprep.subr.mxu0 0.0
    %2014 = vmatpush2.xpose.msra.mxu0 0.0
    %2015 = vmatprep.subr.mxu0 0.0
    %2016 = vmatpush2.xpose.msra.mxu0 0.0
    %2017 = vmatprep.subr.mxu0 0.0
    %2018 = vmatpush2.xpose.msra.mxu0 0.0
    %2019 = vmatprep.subr.mxu0 0.0
    %2020 = vmatpush2.xpose.msra.mxu0 0.0
    %2021 = vmatprep.subr.mxu0 0.0
    %2022 = vmatpush2.xpose.msra.mxu0 0.0
    %2023 = vmatprep.subr.mxu0 0.0
    %2024 = vmatpush2.xpose.msra.mxu0 0.0
    %2025 = vmatprep.subr.mxu0 0.0
    %2026 = vmatpush2.xpose.msra.mxu0 0.0
    %2027 = vmatprep.subr.mxu0 0.0
    %2028 = vmatpush2.xpose.msra.mxu0 0.0
    %2029 = vmatprep.subr.mxu0 0.0
    %2030 = vmatpush2.xpose.msra.mxu0 0.0
    %2031 = vmatprep.subr.mxu0 0.0
    %2032 = vmatpush2.xpose.msra.mxu0 0.0
    %2033 = vmatprep.subr.mxu0 0.0
    %2034 = vmatpush2.xpose.msra.mxu0 0.0
    %2035 = vmatprep.subr.mxu0 0.0
    %2036 = vmatpush2.xpose.msra.mxu0 0.0
    %2037 = vmatprep.subr.mxu0 0.0
    %2038 = vmatpush2.xpose.msra.mxu0 0.0
    %2039 = vmatprep.mubr.f32.mxu0 0.0
    %2040 = vmatmul.mubr.f32.gmra.mxu0 %v1962
    %v2041 = vpop.f32.mrf.mxu0
    %v2042 = vadd.f32 %v1947, %v2041
    %v2043 = vpop.f32.mrf.mxu0
    %2044 = vmatprep.mubr.f32.mxu0 0.0
    %2045 = vmatmul.mubr.f32.gmra.mxu0 %v1965
    %v2046 = vpop.f32.mrf.mxu0
    %v2047 = vadd.f32 %v1947, %v2046
    %v2048 = vpop.f32.mrf.mxu0
    %2049 = vdwg.mxu0
    %v2050 = vadd.f32 %v1855, %v2042
    %v2051 = vadd.f32 %v1856, %v2047
    %v2052 = vsel %vm51, %v2050, 0.0
    %v2053 = vrot.slane %v2052, 4
    %v2054 = vadd.f32 %v2052, %v2053
    %v2055 = vrot.slane %v2054, 2
    %v2056 = vadd.f32 %v2054, %v2055
    %v2057 = vrot.slane %v2056, 1
    %v2058 = vadd.f32 %v2056, %v2057
    %v2059 = vmul.f32 %v2058, %v1809
    %v2060 = vsub.f32 %v2050, %v2059
    %v2061 = vmul.f32 %v2060, %v2060
    %v2062 = vsel %vm51, %v2061, 0.0
    %v2063 = vrot.slane %v2062, 4
    %v2064 = vadd.f32 %v2062, %v2063
    %v2065 = vrot.slane %v2064, 2
    %v2066 = vadd.f32 %v2064, %v2065
    %v2067 = vrot.slane %v2066, 1
    %v2068 = vadd.f32 %v2066, %v2067
    %v2069 = vmul.f32 %v2068, %v1809
    %v2070 = vadd.f32 %v2069, 1e-05
    %v2071 = vrsqrt.pop %v2070
    %v2072 = vmul.f32 %v2060, %v2071
    %v2073 = vsel %vm51, %v2051, 0.0
    %v2074 = vrot.slane %v2073, 4
    %v2075 = vadd.f32 %v2073, %v2074
    %v2076 = vrot.slane %v2075, 2
    %v2077 = vadd.f32 %v2075, %v2076
    %v2078 = vrot.slane %v2077, 1
    %v2079 = vadd.f32 %v2077, %v2078
    %v2080 = vmul.f32 %v2079, %v1809
    %v2081 = vsub.f32 %v2051, %v2080
    %v2082 = vmul.f32 %v2081, %v2081
    %v2083 = vsel %vm51, %v2082, 0.0
    %v2084 = vrot.slane %v2083, 4
    %v2085 = vadd.f32 %v2083, %v2084
    %v2086 = vrot.slane %v2085, 2
    %v2087 = vadd.f32 %v2085, %v2086
    %v2088 = vrot.slane %v2087, 1
    %v2089 = vadd.f32 %v2087, %v2088
    %v2090 = vmul.f32 %v2089, %v1809
    %v2091 = vadd.f32 %v2090, 1e-05
    %v2092 = vrsqrt.pop %v2091
    %v2093 = vmul.f32 %v2081, %v2092
    %v2094 = vlaneseq
    %v2095 = vshrl.u32 %v2094, 7
    %v2096 = vsub.s32 5, %v2095
    %v2097 = vrot.slane %v50, %v2096
    %v2098 = vmul.f32 %v2097, %v2072
    %v2099 = vmul.f32 %v2097, %v2093
    %v2100 = vlaneseq
    %v2101 = vshrl.u32 %v2100, 7
    %v2102 = vsub.s32 6, %v2101
    %v2103 = vrot.slane %v50, %v2102
    %v2104 = vadd.f32 %v2098, %v2103
    %v2105 = vadd.f32 %v2099, %v2103
    %2106 = vst.msk [vmem:[#allocation7] sm:$0xff] %vm51, %v2104
    %2107 = vst.msk [vmem:[#allocation7 + $0x8] sm:$0xff] %vm51, %v2105
    // Predicated region
    $region18: #{encoder_layer.1} parent=1 // pred_check
      _
    $region19: #{encoder_layer.1} parent=1 // pred_check_branch
      %2109 = sbr.rel (0) target = $region21
    $region20: #{encoder_layer.1} parent=1 // pred_region
      %s2111 = ssub.s32 256, 256
      %2112 = vsyncadd [#allocation4], %s2111
      %s2113 = sshll.u32 [#allocation7], 4
      %s2114 = int_to_ptr.vmem [resolvable:$true] %s2113
      %2119 = dma.vmem_to_hbm [thread:$0]  %s2114, 256, %s2, [#allocation4], 128, 128, 8
    $region21: #{encoder_layer.1} parent=1 // pred_fallthru
      _
    // Predicated region
    $region22: #{encoder_layer.1} parent=1 // pred_check
      _
    $region23: #{encoder_layer.1} parent=1 // pred_check_branch
      %2121 = sbr.rel (0) target = $region25
    $region24: #{encoder_layer.1} parent=1 // pred_region
      %2122 = dma.done [#allocation4], 256
    $region25: #{encoder_layer.1} parent=1 // pred_fallthru
      _
    %2123 = vsyncpa [#allocation3], 1
    %2124 = vsyncpa [#allocation6], 1
    %2125 = vsyncpa [#allocation4], 1

</llo_original>
